<compile_context>
chip_gen: v7x
topology: tpu7x:2x2x1
jax: 0.10.0
libtpu: 0.0.40
codegen_flags: <defaults>
</compile_context>

<pallas_src>
from functools import partial

import jax
import jax.numpy as jnp
import numpy as np
from jax import lax
from jax.experimental import pallas as pl
from jax.experimental.pallas import tpu as pltpu


# ---------------------------------------------------------------------------
# Fused kernel: [im2col-conv matmul + bias + ReLU] -> [projection matmul + bias]
# for one row tile of the token matrix.  Intermediate never touches HBM.
# ---------------------------------------------------------------------------
def _fused_embed_kernel(x_ref, w1_ref, b1_ref, w2_ref, b2_ref, o_ref):
    # x_ref: (tm, Kp) bf16   w1_ref: (Kp, Cf) bf16   b1_ref: (1, Cf) f32
    # w2_ref: (Cf, E) bf16   b2_ref: (1, E)  f32     o_ref: (tm, E) f32
    # Backbone conv stage (im2col): bf16 MXU operands, f32 accumulation.
    h = jnp.dot(x_ref[...], w1_ref[...], preferred_element_type=jnp.float32)
    h = jnp.maximum(h + b1_ref[...], 0.0)           # bias + ReLU in f32 (VPU)
    # nn.Linear projection on the same tile; recast only the MXU operand.
    y = jnp.dot(h.astype(w2_ref.dtype), w2_ref[...],
                preferred_element_type=jnp.float32)
    o_ref[...] = (y + b2_ref[...]).astype(o_ref.dtype)


def _round_up(x, m):
    return ((x + m - 1) // m) * m


def _pick_row_tile(m, min_steps=4, max_tile=256):
    # Largest tile (<= max_tile) that still gives the pipeline >= min_steps
    # grid steps (DMA/compute overlap; >= 2 * num_TCs so v7x sharding is real).
    best = None
    for t in (256, 128, 64, 32, 16, 8):
        if t > max_tile or m % t:
            continue
        if m // t >= min_steps:
            return t
        if best is None:
            best = t
    return best if best is not None else m


def fused_hybrid_embed(patches, w1, b1, w2, b2, *, single_buffer_weights=True):
    m, kp = patches.shape
    cf = w1.shape[1]
    e = w2.shape[1]
    tm = _pick_row_tile(m)

    def resident(shape):
        # Grid-invariant blocks (index_map always (0, 0)); single-buffer them
        # so the resident weights are not duplicated in VMEM.
        if single_buffer_weights:
            return pl.BlockSpec(shape, lambda i: (0, 0),
                                pipeline_mode=pl.Buffered(1))
        return pl.BlockSpec(shape, lambda i: (0, 0))

    cost = pl.CostEstimate(
        flops=2 * m * kp * cf + 2 * m * cf * e,
        transcendentals=0,
        bytes_accessed=(m * kp * 2 + kp * cf * 2 + cf * e * 2
                        + cf * 4 + e * 4 + m * e * 4),
    )

    return pl.pallas_call(
        _fused_embed_kernel,
        grid=(m // tm,),
        in_specs=[
            pl.BlockSpec((tm, kp), lambda i: (i, 0)),   # row tile of patches
            resident((kp, cf)),                         # conv weight
            resident((1, cf)),                          # conv bias
            resident((cf, e)),                          # proj weight
            resident((1, e)),                           # proj bias
        ],
        out_specs=pl.BlockSpec((tm, e), lambda i: (i, 0)),
        out_shape=jax.ShapeDtypeStruct((m, e), jnp.float32),
        compiler_params=pltpu.CompilerParams(
            dimension_semantics=("parallel",),
            vmem_limit_bytes=32 * 1024 * 1024),
        cost_estimate=cost,
    )(patches, w1, b1, w2, b2)


# ---------------------------------------------------------------------------
# Layout glue: im2col for a 3x3 / stride-2 / pad-1 conv (pure data movement in
# the wrapper -> a single lane-dense matmul inside the kernel).
# TODO(synk): for realistic Cin, form the 9 taps in-kernel (strided pl.ds /
#             pltpu.roll on a DMA'd row band) to avoid the 9x patch blow-up.
# ---------------------------------------------------------------------------
def _im2col_3x3_s2(x_nhwc):
    n, h, w, c = x_nhwc.shape
    ho = (h + 2 - 3) // 2 + 1
    wo = (w + 2 - 3) // 2 + 1
    xp = jnp.pad(x_nhwc, ((0, 0), (1, 1), (1, 1), (0, 0)))
    taps = []
    for kh in range(3):
        for kw in range(3):
            taps.append(xp[:, kh:kh + 2 * ho:2, kw:kw + 2 * wo:2, :])
    patches = jnp.concatenate(taps, axis=-1)          # (N, Ho, Wo, 9*C)
    return patches.reshape(n * ho * wo, 9 * c), (n, ho, wo)


# ---------------------------------------------------------------------------
# Full HybridEmbed forward (NCHW image in, (N, num_patches, embed_dim) out).
# ---------------------------------------------------------------------------
def hybrid_embed_forward(x_nchw, params, *, single_buffer_weights=True):
    # ---- backbone(x)[-1] stand-in: 3x3/s2 conv + ReLU via one im2col matmul
    x_nhwc = jnp.transpose(x_nchw, (0, 2, 3, 1))
    patches, (n, ho, wo) = _im2col_3x3_s2(x_nhwc)
    cin = x_nhwc.shape[-1]
    cfeat = params["w_conv"].shape[-1]
    embed_dim = params["w_proj"].shape[-1]

    k_raw = 9 * cin
    k_pad = _round_up(k_raw, 8)                       # 27 -> 32, zero filled
    w1 = params["w_conv"].reshape(k_raw, cfeat)       # HWIO -> (9*Cin, Cfeat)
    if k_pad != k_raw:
        patches = jnp.pad(patches, ((0, 0), (0, k_pad - k_raw)))
        w1 = jnp.pad(w1, ((0, k_pad - k_raw), (0, 0)))

    # ---- fused [conv + ReLU] -> [flatten(2).transpose(1,2) (free)] -> proj
    out_flat = fused_hybrid_embed(
        patches.astype(jnp.bfloat16),
        w1.astype(jnp.bfloat16),
        params["b_conv"].astype(jnp.float32),
        params["w_proj"].astype(jnp.bfloat16),
        params["b_proj"].astype(jnp.float32),
        single_buffer_weights=single_buffer_weights,
    )
    return out_flat.reshape(n, ho * wo, embed_dim)


# ---------------------------------------------------------------------------
# Pure-JAX f32 reference (for correctness check).
# ---------------------------------------------------------------------------
def reference(x_nchw, p):
    x = jnp.transpose(x_nchw, (0, 2, 3, 1))                   # NHWC
    feat = lax.conv_general_dilated(
        x, p["w_conv"], window_strides=(2, 2), padding=((1, 1), (1, 1)),
        dimension_numbers=("NHWC", "HWIO", "NHWC"),
        precision=lax.Precision.HIGHEST)
    feat = jnp.maximum(feat + p["b_conv"].reshape(1, 1, 1, -1), 0.0)
    n, hf, wf, c = feat.shape
    tokens = feat.reshape(n, hf * wf, c)   # == flatten(2).transpose(1,2) of NCHW
    out = jnp.einsum("ntc,ce->nte", tokens, p["w_proj"],
                     precision=lax.Precision.HIGHEST)
    return out + p["b_proj"].reshape(1, 1, -1)


if __name__ == "__main__":
    # Small demo shapes: batch=2, in_chans=3, 32x32 image -> 16x16 feature map,
    # feature_dim=256, embed_dim=256 (lane-dense, full 256-wide MXU slabs).
    N, Cin, H, W = 2, 3, 32, 32
    FEAT, EMBED = 256, 256

    key = jax.random.PRNGKey(0)
    ks = jax.random.split(key, 5)
    params = {
        # backbone conv weight stored HWIO; proj is the nn.Linear weight (in, out)
        "w_conv": 0.1 * jax.random.normal(ks[0], (3, 3, Cin, FEAT), jnp.float32),
        "b_conv": 0.1 * jax.random.normal(ks[1], (1, FEAT), jnp.float32),
        "w_proj": 0.05 * jax.random.normal(ks[2], (FEAT, EMBED), jnp.float32),
        "b_proj": 0.05 * jax.random.normal(ks[3], (1, EMBED), jnp.float32),
    }
    x = jax.random.normal(ks[4], (N, Cin, H, W), jnp.float32)

    fwd_fast = jax.jit(partial(hybrid_embed_forward, single_buffer_weights=True))
    fwd_safe = jax.jit(partial(hybrid_embed_forward, single_buffer_weights=False))
    try:
        out = jax.block_until_ready(fwd_fast(x, params))
    except Exception:
        # pl.Buffered(1) on the resident weight blocks not supported by this
        # jax build -> fall back to default (double-buffered) weight blocks.
        out = jax.block_until_ready(fwd_safe(x, params))

    num_patches = ((H + 2 - 3) // 2 + 1) * ((W + 2 - 3) // 2 + 1)
    assert out.shape == (N, num_patches, EMBED), out.shape

    ref = reference(x, params)
    # bf16 MXU operands (f32 accumulation) vs. f32 HIGHEST reference -> ~1% tol.
    np.testing.assert_allclose(np.asarray(out), np.asarray(ref),
                               rtol=2e-2, atol=2e-2)
    print("KERNEL_OK")
</pallas_src>

<mosaic_0001>
module attributes {stable_mosaic.version = 11 : i64} {
  func.func @_fused_embed_kernel(%arg0: i32, %arg1: memref<128x32xbf16, #tpu.memory_space<vmem>>, %arg2: memref<32x256xbf16, #tpu.memory_space<vmem>>, %arg3: memref<1x256xf32, #tpu.memory_space<vmem>>, %arg4: memref<256x256xbf16, #tpu.memory_space<vmem>>, %arg5: memref<1x256xf32, #tpu.memory_space<vmem>>, %arg6: memref<128x256xf32, #tpu.memory_space<vmem>>) attributes {dimension_semantics = [#tpu.dimension_semantics<parallel>], iteration_bounds = array<i64: 4>, scalar_prefetch = 0 : i64, scratch_operands = 0 : i64, tpu.core_type = #tpu.core_type<tc>, window_params = [{transform_indices = @transform_0, window_bounds = array<i64: 128, 32>}, {pipeline_mode = #tpu.pipeline_mode<synchronous>, transform_indices = @transform_1, window_bounds = array<i64: 32, 256>}, {pipeline_mode = #tpu.pipeline_mode<synchronous>, transform_indices = @transform_2, window_bounds = array<i64: 1, 256>}, {pipeline_mode = #tpu.pipeline_mode<synchronous>, transform_indices = @transform_3, window_bounds = array<i64: 256, 256>}, {pipeline_mode = #tpu.pipeline_mode<synchronous>, transform_indices = @transform_4, window_bounds = array<i64: 1, 256>}, {transform_indices = @transform_5, window_bounds = array<i64: 128, 256>}]} {
    %c0 = arith.constant 0 : index
    %c0_0 = arith.constant 0 : index
    %0 = vector.load %arg1[%c0, %c0_0] : memref<128x32xbf16, #tpu.memory_space<vmem>>, vector<128x32xbf16>
    %c0_1 = arith.constant 0 : index
    %c0_2 = arith.constant 0 : index
    %1 = vector.load %arg2[%c0_1, %c0_2] : memref<32x256xbf16, #tpu.memory_space<vmem>>, vector<32x256xbf16>
    %cst = arith.constant dense<0.000000e+00> : vector<128x256xf32>
    %2 = tpu.matmul %0, %1, %cst {dimension_numbers = #tpu.dot_dimension_numbers<[1], [0], [0], [1], [0, 0, 1, 1], [], []>} : vector<128x32xbf16>, vector<32x256xbf16>, vector<128x256xf32> -> vector<128x256xf32>
    %c0_3 = arith.constant 0 : index
    %c0_4 = arith.constant 0 : index
    %3 = vector.load %arg3[%c0_3, %c0_4] : memref<1x256xf32, #tpu.memory_space<vmem>>, vector<1x256xf32>
    %4 = vector.broadcast %3 : vector<1x256xf32> to vector<128x256xf32>
    %5 = arith.addf %2, %4 : vector<128x256xf32>
    %cst_5 = arith.constant 0.000000e+00 : f32
    %6 = vector.broadcast %cst_5 : f32 to vector<128x256xf32>
    %7 = arith.maximumf %5, %6 : vector<128x256xf32>
    %8 = arith.truncf %7 : vector<128x256xf32> to vector<128x256xbf16>
    %c0_6 = arith.constant 0 : index
    %c0_7 = arith.constant 0 : index
    %9 = vector.load %arg4[%c0_6, %c0_7] : memref<256x256xbf16, #tpu.memory_space<vmem>>, vector<256x256xbf16>
    %cst_8 = arith.constant dense<0.000000e+00> : vector<128x256xf32>
    %10 = tpu.matmul %8, %9, %cst_8 {dimension_numbers = #tpu.dot_dimension_numbers<[1], [0], [0], [1], [0, 0, 1, 1], [], []>} : vector<128x256xbf16>, vector<256x256xbf16>, vector<128x256xf32> -> vector<128x256xf32>
    %c0_9 = arith.constant 0 : index
    %c0_10 = arith.constant 0 : index
    %11 = vector.load %arg5[%c0_9, %c0_10] : memref<1x256xf32, #tpu.memory_space<vmem>>, vector<1x256xf32>
    %12 = vector.broadcast %11 : vector<1x256xf32> to vector<128x256xf32>
    %13 = arith.addf %10, %12 : vector<128x256xf32>
    %c0_11 = arith.constant 0 : index
    %c0_12 = arith.constant 0 : index
    %14 = vector.load %arg6[%c0_11, %c0_12] : memref<128x256xf32, #tpu.memory_space<vmem>>, vector<128x256xf32>
    tpu.vector_store %arg6[%c0_11, %c0_12], %13 {strides = array<i32>} : memref<128x256xf32, #tpu.memory_space<vmem>>, vector<128x256xf32>,
    return
  }
  func.func @transform_0(%arg0: i32) -> (i32, i32) {
    %c0_i32 = arith.constant 0 : i32
    %c0_i32_0 = arith.constant 0 : i32
    return %arg0, %c0_i32 : i32, i32
  }
  func.func @transform_1(%arg0: i32) -> (i32, i32) {
    %c0_i32 = arith.constant 0 : i32
    %c0_i32_0 = arith.constant 0 : i32
    %c0_i32_1 = arith.constant 0 : i32
    return %c0_i32, %c0_i32_0 : i32, i32
  }
  func.func @transform_2(%arg0: i32) -> (i32, i32) {
    %c0_i32 = arith.constant 0 : i32
    %c0_i32_0 = arith.constant 0 : i32
    %c0_i32_1 = arith.constant 0 : i32
    return %c0_i32, %c0_i32_0 : i32, i32
  }
  func.func @transform_3(%arg0: i32) -> (i32, i32) {
    %c0_i32 = arith.constant 0 : i32
    %c0_i32_0 = arith.constant 0 : i32
    %c0_i32_1 = arith.constant 0 : i32
    return %c0_i32, %c0_i32_0 : i32, i32
  }
  func.func @transform_4(%arg0: i32) -> (i32, i32) {
    %c0_i32 = arith.constant 0 : i32
    %c0_i32_0 = arith.constant 0 : i32
    %c0_i32_1 = arith.constant 0 : i32
    return %c0_i32, %c0_i32_0 : i32, i32
  }
  func.func @transform_5(%arg0: i32) -> (i32, i32) {
    %c0_i32 = arith.constant 0 : i32
    %c0_i32_0 = arith.constant 0 : i32
    return %arg0, %c0_i32 : i32, i32
  }
}

module attributes {stable_mosaic.version = 11 : i64} {
  func.func @_fused_embed_kernel(%arg0: i32, %arg1: memref<128x32xbf16, #tpu.memory_space<vmem>>, %arg2: memref<32x256xbf16, #tpu.memory_space<vmem>>, %arg3: memref<1x256xf32, #tpu.memory_space<vmem>>, %arg4: memref<256x256xbf16, #tpu.memory_space<vmem>>, %arg5: memref<1x256xf32, #tpu.memory_space<vmem>>, %arg6: memref<128x256xf32, #tpu.memory_space<vmem>>) attributes {dimension_semantics = [#tpu.dimension_semantics<parallel>], iteration_bounds = array<i64: 4>, scalar_prefetch = 0 : i64, scratch_operands = 0 : i64, tpu.core_type = #tpu.core_type<tc>, window_params = [{transform_indices = @transform_0, window_bounds = array<i64: 128, 32>}, {pipeline_mode = #tpu.pipeline_mode<synchronous>, transform_indices = @transform_1, window_bounds = array<i64: 32, 256>}, {pipeline_mode = #tpu.pipeline_mode<synchronous>, transform_indices = @transform_2, window_bounds = array<i64: 1, 256>}, {pipeline_mode = #tpu.pipeline_mode<synchronous>, transform_indices = @transform_3, window_bounds = array<i64: 256, 256>}, {pipeline_mode = #tpu.pipeline_mode<synchronous>, transform_indices = @transform_4, window_bounds = array<i64: 1, 256>}, {transform_indices = @transform_5, window_bounds = array<i64: 128, 256>}]} {
    %c0 = arith.constant 0 : index
    %c0_0 = arith.constant 0 : index
    %0 = vector.load %arg1[%c0, %c0_0] : memref<128x32xbf16, #tpu.memory_space<vmem>>, vector<128x32xbf16>
    %c0_1 = arith.constant 0 : index
    %c0_2 = arith.constant 0 : index
    %1 = vector.load %arg2[%c0_1, %c0_2] : memref<32x256xbf16, #tpu.memory_space<vmem>>, vector<32x256xbf16>
    %cst = arith.constant dense<0.000000e+00> : vector<128x256xf32>
    %2 = tpu.matmul %0, %1, %cst {dimension_numbers = #tpu.dot_dimension_numbers<[1], [0], [0], [1], [0, 0, 1, 1], [], []>} : vector<128x32xbf16>, vector<32x256xbf16>, vector<128x256xf32> -> vector<128x256xf32>
    %c0_3 = arith.constant 0 : index
    %c0_4 = arith.constant 0 : index
    %3 = vector.load %arg3[%c0_3, %c0_4] : memref<1x256xf32, #tpu.memory_space<vmem>>, vector<1x256xf32>
    %4 = vector.broadcast %3 : vector<1x256xf32> to vector<128x256xf32>
    %5 = arith.addf %2, %4 : vector<128x256xf32>
    %cst_5 = arith.constant 0.000000e+00 : f32
    %6 = vector.broadcast %cst_5 : f32 to vector<128x256xf32>
    %7 = arith.maximumf %5, %6 : vector<128x256xf32>
    %8 = arith.truncf %7 : vector<128x256xf32> to vector<128x256xbf16>
    %c0_6 = arith.constant 0 : index
    %c0_7 = arith.constant 0 : index
    %9 = vector.load %arg4[%c0_6, %c0_7] : memref<256x256xbf16, #tpu.memory_space<vmem>>, vector<256x256xbf16>
    %cst_8 = arith.constant dense<0.000000e+00> : vector<128x256xf32>
    %10 = tpu.matmul %8, %9, %cst_8 {dimension_numbers = #tpu.dot_dimension_numbers<[1], [0], [0], [1], [0, 0, 1, 1], [], []>} : vector<128x256xbf16>, vector<256x256xbf16>, vector<128x256xf32> -> vector<128x256xf32>
    %c0_9 = arith.constant 0 : index
    %c0_10 = arith.constant 0 : index
    %11 = vector.load %arg5[%c0_9, %c0_10] : memref<1x256xf32, #tpu.memory_space<vmem>>, vector<1x256xf32>
    %12 = vector.broadcast %11 : vector<1x256xf32> to vector<128x256xf32>
    %13 = arith.addf %10, %12 : vector<128x256xf32>
    %c0_11 = arith.constant 0 : index
    %c0_12 = arith.constant 0 : index
    %14 = vector.load %arg6[%c0_11, %c0_12] : memref<128x256xf32, #tpu.memory_space<vmem>>, vector<128x256xf32>
    tpu.vector_store %arg6[%c0_11, %c0_12], %13 {strides = array<i32>} : memref<128x256xf32, #tpu.memory_space<vmem>>, vector<128x256xf32>,
    return
  }
  func.func @transform_0(%arg0: i32) -> (i32, i32) {
    %c0_i32 = arith.constant 0 : i32
    %c0_i32_0 = arith.constant 0 : i32
    return %arg0, %c0_i32 : i32, i32
  }
  func.func @transform_1(%arg0: i32) -> (i32, i32) {
    %c0_i32 = arith.constant 0 : i32
    %c0_i32_0 = arith.constant 0 : i32
    %c0_i32_1 = arith.constant 0 : i32
    return %c0_i32, %c0_i32_0 : i32, i32
  }
  func.func @transform_2(%arg0: i32) -> (i32, i32) {
    %c0_i32 = arith.constant 0 : i32
    %c0_i32_0 = arith.constant 0 : i32
    %c0_i32_1 = arith.constant 0 : i32
    return %c0_i32, %c0_i32_0 : i32, i32
  }
  func.func @transform_3(%arg0: i32) -> (i32, i32) {
    %c0_i32 = arith.constant 0 : i32
    %c0_i32_0 = arith.constant 0 : i32
    %c0_i32_1 = arith.constant 0 : i32
    return %c0_i32, %c0_i32_0 : i32, i32
  }
  func.func @transform_4(%arg0: i32) -> (i32, i32) {
    %c0_i32 = arith.constant 0 : i32
    %c0_i32_0 = arith.constant 0 : i32
    %c0_i32_1 = arith.constant 0 : i32
    return %c0_i32, %c0_i32_0 : i32, i32
  }
  func.func @transform_5(%arg0: i32) -> (i32, i32) {
    %c0_i32 = arith.constant 0 : i32
    %c0_i32_0 = arith.constant 0 : i32
    return %arg0, %c0_i32 : i32, i32
  }
}

</mosaic_0001>

<llo_original>
// kernel: hybrid_embed_forward.1
$region0: #{hybrid_embed_forward.1}
  #allocation0 [shape = 'u32[]', space=smem, size = 0x4, offset = 0x4, fixed_abs, tag = 'smem constant byte address 0x4 - core index']
  #allocation1 [shape = 'u32[144,128]{1,0:T(1,128)}', space=vmem, size = 0x12000, scoped, tag = 'internal scratch']
  %s0 = inlined_call_operand.vmem [shape: bf16[512,32], index: 0, kind: input, shape index: {}]
  %s1 = inlined_call_operand.vmem [shape: bf16[32,256], index: 1, kind: input, shape index: {}]
  %s2 = inlined_call_operand.vmem [shape: f32[1,256], index: 2, kind: input, shape index: {}]
  %s3 = inlined_call_operand.vmem [shape: bf16[256,256], index: 3, kind: input, shape index: {}]
  %s4 = inlined_call_operand.vmem [shape: f32[1,256], index: 4, kind: input, shape index: {}]
  %s5 = inlined_call_operand.hbm [shape: f32[512,256], index: 5, kind: output, shape index: {}]
  %s6 = sld [smem:[#allocation0]]
  $region53: #{hybrid_embed_forward.1} parent=0
    _
  %s8 = ssub.s32 1, %s6
  %s9 = scalar_select 0, %s8, %s6
  $region1: #{hybrid_embed_forward.1} parent=0
    #allocation2 [shape = 'u8[262144]{0}', space=vmem, size = 0x40000, scoped, tag = 'output window, operand 0']
    #allocation3 [shape = 's32[2]{0}', space=sflag, size = 0x8, scoped, tag = 'scoped memory for hybrid_embed_forward.1']
    %10 = vsyncpa [#allocation3], 0
    %s11 = scalar_lea.sflag [#allocation3], 1
    %12 = vsyncpa %s11, 0
    loop: start=0, step=1, limit=6
    $region2: #{hybrid_embed_forward.1} parent=1 // loop_pre_header
      _
    $region3: #{hybrid_embed_forward.1} parent=1 // loop_header
      %s14 = sphi 0, %s18
      %p15 = scmp.ge.s32.totalorder %s14, 6
      %s24 = sphi 0, %s26
      %s27 = sphi 0, %s24
      %s28 = sphi 0, %s27
      %s44 = sphi 0, %s28
      %s48 = sphi 0, %s48
      %s50 = sphi 0, %s48
      %s51 = sphi 0, %s50
      %s65 = sphi 0, %s51
      %s69 = sphi 0, %s69
      %s71 = sphi 0, %s69
      %s72 = sphi 0, %s71
      %s86 = sphi 0, %s72
      %s90 = sphi 0, %s90
      %s92 = sphi 0, %s90
      %s93 = sphi 0, %s92
      %s107 = sphi 0, %s93
      %s111 = sphi 0, %s111
      %s113 = sphi 0, %s111
      %s114 = sphi 0, %s113
      %s128 = sphi 0, %s114
      %s134 = sphi 0, %s136
      %s137 = sphi 0, %s134
      %s138 = sphi 0, %s137
      %s154 = sphi 0, %s138
    $region4: #{hybrid_embed_forward.1} parent=1 // loop_header_branch
      %17 = sbr.rel (%p15) target = $region8
    $region5: #{hybrid_embed_forward.1} parent=1 // loop_body
      %s19 = ssub.s32 %s14, 1
      %s20 = ssub.s32 %s14, 2
      %s21 = sadd.s32 %s14, 1
      %s22 = ssub.s32 %s14, %s21
      %p23 = scmp.eq.s32.totalorder %s22, 0
      %s25 = sadd.s32 %s24, 1
      %s26 = scalar_select %p23, %s24, %s25
      %p29 = pneg %p23
      %p30 = scmp.eq.s32.totalorder %s14, 3
      %p31 = por %p29, %p30
      %p32 = scmp.ne.s32.totalorder %s24, %s27
      %p33 = scmp.eq.s32.totalorder %s14, 0
      %p34 = por %p32, %p33
      %p35 = scmp.ne.s32.totalorder %s24, %s27
      %p36 = scmp.eq.s32.totalorder %s19, 3
      %p37 = por %p35, %p36
      %p38 = scmp.ne.s32.totalorder %s27, %s28
      %p39 = scmp.eq.s32.totalorder %s19, 0
      %p40 = por %p38, %p39
      %p41 = scmp.ne.s32.totalorder %s27, %s28
      %p42 = scmp.eq.s32.totalorder %s20, 3
      %p43 = por %p41, %p42
      %p45 = scmp.ne.s32.totalorder %s28, %s44
      %p46 = scmp.eq.s32.totalorder %s20, 0
      %p47 = por %p45, %p46
      %s49 = sadd.s32 %s48, 1
      %p52 = scmp.eq.s32.totalorder %s14, 3
      %p53 = scmp.ne.s32.totalorder %s48, %s50
      %p54 = scmp.eq.s32.totalorder %s14, 0
      %p55 = por %p53, %p54
      %p56 = scmp.ne.s32.totalorder %s48, %s50
      %p57 = scmp.eq.s32.totalorder %s19, 3
      %p58 = por %p56, %p57
      %p59 = scmp.ne.s32.totalorder %s50, %s51
      %p60 = scmp.eq.s32.totalorder %s19, 0
      %p61 = por %p59, %p60
      %p62 = scmp.ne.s32.totalorder %s50, %s51
      %p63 = scmp.eq.s32.totalorder %s20, 3
      %p64 = por %p62, %p63
      %p66 = scmp.ne.s32.totalorder %s51, %s65
      %p67 = scmp.eq.s32.totalorder %s20, 0
      %p68 = por %p66, %p67
      %s70 = sadd.s32 %s69, 1
      %p73 = scmp.eq.s32.totalorder %s14, 3
      %p74 = scmp.ne.s32.totalorder %s69, %s71
      %p75 = scmp.eq.s32.totalorder %s14, 0
      %p76 = por %p74, %p75
      %p77 = scmp.ne.s32.totalorder %s69, %s71
      %p78 = scmp.eq.s32.totalorder %s19, 3
      %p79 = por %p77, %p78
      %p80 = scmp.ne.s32.totalorder %s71, %s72
      %p81 = scmp.eq.s32.totalorder %s19, 0
      %p82 = por %p80, %p81
      %p83 = scmp.ne.s32.totalorder %s71, %s72
      %p84 = scmp.eq.s32.totalorder %s20, 3
      %p85 = por %p83, %p84
      %p87 = scmp.ne.s32.totalorder %s72, %s86
      %p88 = scmp.eq.s32.totalorder %s20, 0
      %p89 = por %p87, %p88
      %s91 = sadd.s32 %s90, 1
      %p94 = scmp.eq.s32.totalorder %s14, 3
      %p95 = scmp.ne.s32.totalorder %s90, %s92
      %p96 = scmp.eq.s32.totalorder %s14, 0
      %p97 = por %p95, %p96
      %p98 = scmp.ne.s32.totalorder %s90, %s92
      %p99 = scmp.eq.s32.totalorder %s19, 3
      %p100 = por %p98, %p99
      %p101 = scmp.ne.s32.totalorder %s92, %s93
      %p102 = scmp.eq.s32.totalorder %s19, 0
      %p103 = por %p101, %p102
      %p104 = scmp.ne.s32.totalorder %s92, %s93
      %p105 = scmp.eq.s32.totalorder %s20, 3
      %p106 = por %p104, %p105
      %p108 = scmp.ne.s32.totalorder %s93, %s107
      %p109 = scmp.eq.s32.totalorder %s20, 0
      %p110 = por %p108, %p109
      %s112 = sadd.s32 %s111, 1
      %p115 = scmp.eq.s32.totalorder %s14, 3
      %p116 = scmp.ne.s32.totalorder %s111, %s113
      %p117 = scmp.eq.s32.totalorder %s14, 0
      %p118 = por %p116, %p117
      %p119 = scmp.ne.s32.totalorder %s111, %s113
      %p120 = scmp.eq.s32.totalorder %s19, 3
      %p121 = por %p119, %p120
      %p122 = scmp.ne.s32.totalorder %s113, %s114
      %p123 = scmp.eq.s32.totalorder %s19, 0
      %p124 = por %p122, %p123
      %p125 = scmp.ne.s32.totalorder %s113, %s114
      %p126 = scmp.eq.s32.totalorder %s20, 3
      %p127 = por %p125, %p126
      %p129 = scmp.ne.s32.totalorder %s114, %s128
      %p130 = scmp.eq.s32.totalorder %s20, 0
      %p131 = por %p129, %p130
      %s132 = ssub.s32 %s14, %s21
      %p133 = scmp.eq.s32.totalorder %s132, 0
      %s135 = sadd.s32 %s134, 1
      %s136 = scalar_select %p133, %s134, %s135
      %p139 = pneg %p133
      %p140 = scmp.eq.s32.totalorder %s14, 3
      %p141 = por %p139, %p140
      %p142 = scmp.ne.s32.totalorder %s134, %s137
      %p143 = scmp.eq.s32.totalorder %s14, 0
      %p144 = por %p142, %p143
      %p145 = scmp.ne.s32.totalorder %s134, %s137
      %p146 = scmp.eq.s32.totalorder %s19, 3
      %p147 = por %p145, %p146
      %p148 = scmp.ne.s32.totalorder %s137, %s138
      %p149 = scmp.eq.s32.totalorder %s19, 0
      %p150 = por %p148, %p149
      %p151 = scmp.ne.s32.totalorder %s137, %s138
      %p152 = scmp.eq.s32.totalorder %s20, 3
      %p153 = por %p151, %p152
      %p155 = scmp.ne.s32.totalorder %s138, %s154
      %p156 = scmp.eq.s32.totalorder %s20, 0
      %p157 = por %p155, %p156
      %p158 = scmp.le.s32.totalorder 1, %s14
      %p159 = scmp.lt.s32.totalorder %s14, 5
      %p160 = pnand %p158, %p159
      %p161 = pneg %p160
      // Predicated region
      $region9: #{hybrid_embed_forward.1} parent=5 // pred_check
        _
      $region10: #{hybrid_embed_forward.1} parent=5 // pred_check_branch
        %163 = sbr.rel (%p160) target = $region12
      $region11: #{hybrid_embed_forward.1} parent=5 // pred_region
        %s164 = ssub.s32 %s14, 1
        // Predicated region
        $region13: #{hybrid_embed_forward.1} parent=11 // pred_check
          %p165 = pneg %p61
        $region14: #{hybrid_embed_forward.1} parent=11 // pred_check_branch
          %167 = sbr.rel (%p165) target = $region16
        $region15: #{hybrid_embed_forward.1} parent=11 // pred_region
          _
        $region16: #{hybrid_embed_forward.1} parent=11 // pred_fallthru
          _
        // Predicated region
        $region17: #{hybrid_embed_forward.1} parent=11 // pred_check
          %p168 = pneg %p82
        $region18: #{hybrid_embed_forward.1} parent=11 // pred_check_branch
          %170 = sbr.rel (%p168) target = $region20
        $region19: #{hybrid_embed_forward.1} parent=11 // pred_region
          _
        $region20: #{hybrid_embed_forward.1} parent=11 // pred_fallthru
          _
        // Predicated region
        $region21: #{hybrid_embed_forward.1} parent=11 // pred_check
          %p171 = pneg %p103
        $region22: #{hybrid_embed_forward.1} parent=11 // pred_check_branch
          %173 = sbr.rel (%p171) target = $region24
        $region23: #{hybrid_embed_forward.1} parent=11 // pred_region
          _
        $region24: #{hybrid_embed_forward.1} parent=11 // pred_fallthru
          _
        // Predicated region
        $region25: #{hybrid_embed_forward.1} parent=11 // pred_check
          %p174 = pneg %p124
        $region26: #{hybrid_embed_forward.1} parent=11 // pred_check_branch
          %176 = sbr.rel (%p174) target = $region28
        $region27: #{hybrid_embed_forward.1} parent=11 // pred_region
          _
        $region28: #{hybrid_embed_forward.1} parent=11 // pred_fallthru
          _
      $region12: #{hybrid_embed_forward.1} parent=5 // pred_fallthru
        _
      %p177 = scmp.lt.s32.totalorder %s14, 4
      // Predicated region
      $region29: #{hybrid_embed_forward.1} parent=5 // pred_check
        %p178 = pneg %p177
      $region30: #{hybrid_embed_forward.1} parent=5 // pred_check_branch
        %180 = sbr.rel (%p178) target = $region32
      $region31: #{hybrid_embed_forward.1} parent=5 // pred_region
        // Predicated region
        $region33: #{hybrid_embed_forward.1} parent=31 // pred_check
          %p181 = pneg %p34
        $region34: #{hybrid_embed_forward.1} parent=31 // pred_check_branch
          %183 = sbr.rel (%p181) target = $region36
        $region35: #{hybrid_embed_forward.1} parent=31 // pred_region
          %s184 = smul.u32 16, %s14
          %p185 = scmp.lt.s32.totalorder %s184, 63
          %s186 = scalar_select %p185, %s184, 63
          %s187 = smul.addr %s186, 4
          %s188 = scalar_lea.vmem %s0, %s187
          %s189 = smul.u32 16, %s14
        $region36: #{hybrid_embed_forward.1} parent=31 // pred_fallthru
          _
      $region32: #{hybrid_embed_forward.1} parent=5 // pred_fallthru
        _
      %p190 = scmp.le.s32.totalorder 1, %s14
      %p191 = scmp.lt.s32.totalorder %s14, 5
      %p192 = pnand %p190, %p191
      %p193 = pneg %p192
      // Predicated region
      $region37: #{hybrid_embed_forward.1} parent=5 // pred_check
        _
      $region38: #{hybrid_embed_forward.1} parent=5 // pred_check_branch
        %195 = sbr.rel (%p192) target = $region40
      $region39: #{hybrid_embed_forward.1} parent=5 // pred_region
        %s196 = ssub.s32 %s14, 1
        %s197 = smul.u32 16, %s19
        %p198 = scmp.lt.s32.totalorder %s197, 63
        %s199 = scalar_select %p198, %s197, 63
        %s200 = smul.addr %s199, 4
        %s201 = scalar_lea.vmem %s0, %s200
        %p202 = pneg %p40
        %p203 = pneg %p37
        %p204 = pneg %p61
        %p205 = pneg %p58
        %p206 = pneg %p82
        %p207 = pneg %p79
        %p208 = pneg %p103
        %p209 = pneg %p100
        %p210 = pneg %p124
        %p211 = pneg %p121
        %p212 = pneg %p150
        %p213 = pneg %p147
        %s214 = sand.u32 %s137, 1
        %s215 = scalar_lea.sflag [#allocation3], %s214
        %s216 = sand.u32 %s137, 1
        %s217 = smul.addr %s216, 256
        %s218 = scalar_lea.vmem [#allocation2], %s217
        %s219 = smul.u32 16, %s19
        %p220 = scmp.lt.s32.totalorder %s219, 63
        %s221 = scalar_select %p220, %s219, 63
        %s222 = smul.addr %s221, 4
        %s223 = scalar_lea.vmem %s0, %s222
        %s224 = smul.u32 16, %s19
        %s225 = smul.u32 16, %s19
        %v227 = vld [vmem:[%s223] sm:$0xf]
        %v228 = vld [vmem:[%s223 + $0x4] sm:$0xf]
        %v229 = vld [vmem:[%s223 + $0x8] sm:$0xf]
        %v230 = vld [vmem:[%s223 + $0xc] sm:$0xf]
        %v231 = vld [vmem:[%s223 + $0x10] sm:$0xf]
        %v232 = vld [vmem:[%s223 + $0x14] sm:$0xf]
        %v233 = vld [vmem:[%s223 + $0x18] sm:$0xf]
        %v234 = vld [vmem:[%s223 + $0x1c] sm:$0xf]
        %v235 = vld [vmem:[%s223 + $0x20] sm:$0xf]
        %v236 = vld [vmem:[%s223 + $0x24] sm:$0xf]
        %v237 = vld [vmem:[%s223 + $0x28] sm:$0xf]
        %v238 = vld [vmem:[%s223 + $0x2c] sm:$0xf]
        %v239 = vld [vmem:[%s223 + $0x30] sm:$0xf]
        %v240 = vld [vmem:[%s223 + $0x34] sm:$0xf]
        %v241 = vld [vmem:[%s223 + $0x38] sm:$0xf]
        %v242 = vld [vmem:[%s223 + $0x3c] sm:$0xf]
        %v243 = vld [vmem:[%s1] sm:$0xff]
        %v244 = vld [vmem:[%s1 + $0x8] sm:$0xff]
        %v245 = vld [vmem:[%s1 + $0x10] sm:$0xff]
        %v246 = vld [vmem:[%s1 + $0x18] sm:$0xff]
        %v247 = vld [vmem:[%s2] sm:$0x3]
        %v249 = vlaneseq
        %v250 = vshrl.u32 %v249, 7
        %v251 = vsub.s32 0, %v250
        %v252 = vrot.slane %v247, %v251
        %v253 = vlaneseq
        %v254 = vshrl.u32 %v253, 7
        %v255 = vsub.s32 1, %v254
        %v256 = vrot.slane %v247, %v255
        %v275 = vunpack.c.l.b16 %v227
        %v276 = vunpack.c.l.b16 %v228
        %v277 = vunpack.c.l.b16 %v229
        %v278 = vunpack.c.l.b16 %v230
        %v279 = vunpack.c.l.b16 %v231
        %v280 = vunpack.c.l.b16 %v232
        %v281 = vunpack.c.l.b16 %v233
        %v282 = vunpack.c.l.b16 %v234
        %v283 = vunpack.c.l.b16 %v235
        %v284 = vunpack.c.l.b16 %v236
        %v285 = vunpack.c.l.b16 %v237
        %v286 = vunpack.c.l.b16 %v238
        %v287 = vunpack.c.l.b16 %v239
        %v288 = vunpack.c.l.b16 %v240
        %v289 = vunpack.c.l.b16 %v241
        %v290 = vunpack.c.l.b16 %v242
        %v291 = vpack.c.b16 %v276, %v275
        %v292 = vpack.c.b16 %v278, %v277
        %v293 = vpack.c.b16 %v280, %v279
        %v294 = vpack.c.b16 %v282, %v281
        %v295 = vpack.c.b16 %v284, %v283
        %v296 = vpack.c.b16 %v286, %v285
        %v297 = vpack.c.b16 %v288, %v287
        %v298 = vpack.c.b16 %v290, %v289
        %v303 = vunpack.c.l.b16 %v243
        %v304 = vunpack.c.h.b16 %v243
        %v305 = vunpack.c.l.b16 %v244
        %v306 = vunpack.c.h.b16 %v244
        %v307 = vunpack.c.l.b16 %v245
        %v308 = vunpack.c.h.b16 %v245
        %v309 = vunpack.c.l.b16 %v246
        %v310 = vunpack.c.h.b16 %v246
        %v311 = vpack.c.b16 %v305, %v303
        %v312 = vpack.c.b16 %v306, %v304
        %v313 = vpack.c.b16 %v309, %v307
        %v314 = vpack.c.b16 %v310, %v308
        %vm319 = vcmask 261120
        %v321 = vsel %vm319, %v291, 0
        %v324 = vsel %vm319, %v292, 0
        %v327 = vsel %vm319, %v293, 0
        %v330 = vsel %vm319, %v294, 0
        %v333 = vsel %vm319, %v295, 0
        %v336 = vsel %vm319, %v296, 0
        %v339 = vsel %vm319, %v297, 0
        %v342 = vsel %vm319, %v298, 0
        %344 = vmatprep.subr.bf16.mxu0 %v312
        %345 = vmatpush1.bf16.msra.mxu0 %v311
        %346 = vmatprep.subr.bf16.mxu0 %v314
        %347 = vmatpush1.bf16.msra.mxu0 %v313
        %348 = vmatprep.subr.bf16.mxu0 0
        %349 = vmatpush1.bf16.msra.mxu0 0
        %350 = vmatprep.subr.bf16.mxu0 0
        %351 = vmatpush1.bf16.msra.mxu0 0
        %352 = vmatprep.subr.bf16.mxu0 0
        %353 = vmatpush1.bf16.msra.mxu0 0
        %354 = vmatprep.subr.bf16.mxu0 0
        %355 = vmatpush1.bf16.msra.mxu0 0
        %356 = vmatprep.subr.bf16.mxu0 0
        %357 = vmatpush1.bf16.msra.mxu0 0
        %358 = vmatprep.subr.bf16.mxu0 0
        %359 = vmatpush1.bf16.msra.mxu0 0
        %360 = vmatprep.subr.bf16.mxu0 0
        %361 = vmatpush1.bf16.msra.mxu0 0
        %362 = vmatprep.subr.bf16.mxu0 0
        %363 = vmatpush1.bf16.msra.mxu0 0
        %364 = vmatprep.subr.bf16.mxu0 0
        %365 = vmatpush1.bf16.msra.mxu0 0
        %366 = vmatprep.subr.bf16.mxu0 0
        %367 = vmatpush1.bf16.msra.mxu0 0
        %368 = vmatprep.subr.bf16.mxu0 0
        %369 = vmatpush1.bf16.msra.mxu0 0
        %370 = vmatprep.subr.bf16.mxu0 0
        %371 = vmatpush1.bf16.msra.mxu0 0
        %372 = vmatprep.subr.bf16.mxu0 0
        %373 = vmatpush1.bf16.msra.mxu0 0
        %374 = vmatprep.subr.bf16.mxu0 0
        %375 = vmatpush1.bf16.msra.mxu0 0
        %376 = vmatprep.mubr.bf16.mxu0 0
        %377 = vmatmul.mubr.bf16.gmra.mrb[0].mxu0 %v321
        %v378 = vpop.f32.mrb[0].mxu0
        %v379 = vadd.f32 %v252, %v378
        %v380 = vpop.f32.mrb[0].mxu0
        %v381 = vadd.f32 %v256, %v380
        %v382 = vpop.f32.mrb[0].mxu0
        %v383 = vadd.f32 %v252, %v382
        %v384 = vpop.f32.mrb[0].mxu0
        %v385 = vadd.f32 %v256, %v384
        %386 = vmatprep.mubr.bf16.mxu0 0
        %387 = vmatmul.mubr.bf16.gmra.mrb[0].mxu0 %v324
        %v388 = vpop.f32.mrb[0].mxu0
        %v389 = vadd.f32 %v252, %v388
        %v390 = vpop.f32.mrb[0].mxu0
        %v391 = vadd.f32 %v256, %v390
        %v392 = vpop.f32.mrb[0].mxu0
        %v393 = vadd.f32 %v252, %v392
        %v394 = vpop.f32.mrb[0].mxu0
        %v395 = vadd.f32 %v256, %v394
        %396 = vmatprep.mubr.bf16.mxu0 0
        %397 = vmatmul.mubr.bf16.gmra.mrb[0].mxu0 %v327
        %v398 = vpop.f32.mrb[0].mxu0
        %v399 = vadd.f32 %v252, %v398
        %v400 = vpop.f32.mrb[0].mxu0
        %v401 = vadd.f32 %v256, %v400
        %v402 = vpop.f32.mrb[0].mxu0
        %v403 = vadd.f32 %v252, %v402
        %v404 = vpop.f32.mrb[0].mxu0
        %v405 = vadd.f32 %v256, %v404
        %406 = vmatprep.mubr.bf16.mxu0 0
        %407 = vmatmul.mubr.bf16.gmra.mrb[0].mxu0 %v330
        %v408 = vpop.f32.mrb[0].mxu0
        %v409 = vadd.f32 %v252, %v408
        %v410 = vpop.f32.mrb[0].mxu0
        %v411 = vadd.f32 %v256, %v410
        %v412 = vpop.f32.mrb[0].mxu0
        %v413 = vadd.f32 %v252, %v412
        %v414 = vpop.f32.mrb[0].mxu0
        %v415 = vadd.f32 %v256, %v414
        %416 = vmatprep.mubr.bf16.mxu0 0
        %417 = vmatmul.mubr.bf16.gmra.mrb[0].mxu0 %v333
        %v418 = vpop.f32.mrb[0].mxu0
        %v419 = vadd.f32 %v252, %v418
        %v420 = vpop.f32.mrb[0].mxu0
        %v421 = vadd.f32 %v256, %v420
        %v422 = vpop.f32.mrb[0].mxu0
        %v423 = vadd.f32 %v252, %v422
        %v424 = vpop.f32.mrb[0].mxu0
        %v425 = vadd.f32 %v256, %v424
        %426 = vmatprep.mubr.bf16.mxu0 0
        %427 = vmatmul.mubr.bf16.gmra.mrb[0].mxu0 %v336
        %v428 = vpop.f32.mrb[0].mxu0
        %v429 = vadd.f32 %v252, %v428
        %v430 = vpop.f32.mrb[0].mxu0
        %v431 = vadd.f32 %v256, %v430
        %v432 = vpop.f32.mrb[0].mxu0
        %v433 = vadd.f32 %v252, %v432
        %v434 = vpop.f32.mrb[0].mxu0
        %v435 = vadd.f32 %v256, %v434
        %436 = vmatprep.mubr.bf16.mxu0 0
        %437 = vmatmul.mubr.bf16.gmra.mrb[0].mxu0 %v339
        %v438 = vpop.f32.mrb[0].mxu0
        %v439 = vadd.f32 %v252, %v438
        %v440 = vpop.f32.mrb[0].mxu0
        %v441 = vadd.f32 %v256, %v440
        %v442 = vpop.f32.mrb[0].mxu0
        %v443 = vadd.f32 %v252, %v442
        %v444 = vpop.f32.mrb[0].mxu0
        %v445 = vadd.f32 %v256, %v444
        %446 = vmatprep.mubr.bf16.mxu0 0
        %447 = vmatmul.mubr.bf16.gmra.mrb[0].mxu0 %v342
        %v448 = vpop.f32.mrb[0].mxu0
        %v449 = vadd.f32 %v252, %v448
        %v450 = vpop.f32.mrb[0].mxu0
        %v451 = vadd.f32 %v256, %v450
        %v452 = vpop.f32.mrb[0].mxu0
        %v453 = vadd.f32 %v252, %v452
        %v454 = vpop.f32.mrb[0].mxu0
        %v455 = vadd.f32 %v256, %v454
        %456 = vdwg.mxu0
        %v457 = vmax.f32 %v379, 0.0
        %v458 = vmax.f32 %v381, 0.0
        %v459 = vmax.f32 %v383, 0.0
        %v460 = vmax.f32 %v385, 0.0
        %v461 = vmax.f32 %v389, 0.0
        %v462 = vmax.f32 %v391, 0.0
        %v463 = vmax.f32 %v393, 0.0
        %v464 = vmax.f32 %v395, 0.0
        %v465 = vmax.f32 %v399, 0.0
        %v466 = vmax.f32 %v401, 0.0
        %v467 = vmax.f32 %v403, 0.0
        %v468 = vmax.f32 %v405, 0.0
        %v469 = vmax.f32 %v409, 0.0
        %v470 = vmax.f32 %v411, 0.0
        %v471 = vmax.f32 %v413, 0.0
        %v472 = vmax.f32 %v415, 0.0
        %v473 = vmax.f32 %v419, 0.0
        %v474 = vmax.f32 %v421, 0.0
        %v475 = vmax.f32 %v423, 0.0
        %v476 = vmax.f32 %v425, 0.0
        %v477 = vmax.f32 %v429, 0.0
        %v478 = vmax.f32 %v431, 0.0
        %v479 = vmax.f32 %v433, 0.0
        %v480 = vmax.f32 %v435, 0.0
        %v481 = vmax.f32 %v439, 0.0
        %v482 = vmax.f32 %v441, 0.0
        %v483 = vmax.f32 %v443, 0.0
        %v484 = vmax.f32 %v445, 0.0
        %v485 = vmax.f32 %v449, 0.0
        %v486 = vmax.f32 %v451, 0.0
        %v487 = vmax.f32 %v453, 0.0
        %v488 = vmax.f32 %v455, 0.0
        %v489 = vpack.c.bf16 %v459, %v457
        %v490 = vpack.c.bf16 %v460, %v458
        %v491 = vpack.c.bf16 %v463, %v461
        %v492 = vpack.c.bf16 %v464, %v462
        %v493 = vpack.c.bf16 %v467, %v465
        %v494 = vpack.c.bf16 %v468, %v466
        %v495 = vpack.c.bf16 %v471, %v469
        %v496 = vpack.c.bf16 %v472, %v470
        %v497 = vpack.c.bf16 %v475, %v473
        %v498 = vpack.c.bf16 %v476, %v474
        %v499 = vpack.c.bf16 %v479, %v477
        %v500 = vpack.c.bf16 %v480, %v478
        %v501 = vpack.c.bf16 %v483, %v481
        %v502 = vpack.c.bf16 %v484, %v482
        %v503 = vpack.c.bf16 %v487, %v485
        %v504 = vpack.c.bf16 %v488, %v486
        %v505 = vld [vmem:[%s3] sm:$0xff]
        %v506 = vld [vmem:[%s3 + $0x8] sm:$0xff]
        %v507 = vld [vmem:[%s3 + $0x10] sm:$0xff]
        %v508 = vld [vmem:[%s3 + $0x18] sm:$0xff]
        %v509 = vld [vmem:[%s3 + $0x20] sm:$0xff]
        %v510 = vld [vmem:[%s3 + $0x28] sm:$0xff]
        %v511 = vld [vmem:[%s3 + $0x30] sm:$0xff]
        %v512 = vld [vmem:[%s3 + $0x38] sm:$0xff]
        %v513 = vld [vmem:[%s3 + $0x40] sm:$0xff]
        %v514 = vld [vmem:[%s3 + $0x48] sm:$0xff]
        %v515 = vld [vmem:[%s3 + $0x50] sm:$0xff]
        %v516 = vld [vmem:[%s3 + $0x58] sm:$0xff]
        %v517 = vld [vmem:[%s3 + $0x60] sm:$0xff]
        %v518 = vld [vmem:[%s3 + $0x68] sm:$0xff]
        %v519 = vld [vmem:[%s3 + $0x70] sm:$0xff]
        %v520 = vld [vmem:[%s3 + $0x78] sm:$0xff]
        %v521 = vld [vmem:[%s3 + $0x80] sm:$0xff]
        %v522 = vld [vmem:[%s3 + $0x88] sm:$0xff]
        %v523 = vld [vmem:[%s3 + $0x90] sm:$0xff]
        %v524 = vld [vmem:[%s3 + $0x98] sm:$0xff]
        %v525 = vld [vmem:[%s3 + $0xa0] sm:$0xff]
        %v526 = vld [vmem:[%s3 + $0xa8] sm:$0xff]
        %v527 = vld [vmem:[%s3 + $0xb0] sm:$0xff]
        %v528 = vld [vmem:[%s3 + $0xb8] sm:$0xff]
        %v529 = vld [vmem:[%s3 + $0xc0] sm:$0xff]
        %v530 = vld [vmem:[%s3 + $0xc8] sm:$0xff]
        %v531 = vld [vmem:[%s3 + $0xd0] sm:$0xff]
        %v532 = vld [vmem:[%s3 + $0xd8] sm:$0xff]
        %v533 = vld [vmem:[%s3 + $0xe0] sm:$0xff]
        %v534 = vld [vmem:[%s3 + $0xe8] sm:$0xff]
        %v535 = vld [vmem:[%s3 + $0xf0] sm:$0xff]
        %v536 = vld [vmem:[%s3 + $0xf8] sm:$0xff]
        %v537 = vld [vmem:[%s4] sm:$0x3]
        %v539 = vlaneseq
        %v540 = vshrl.u32 %v539, 7
        %v541 = vsub.s32 0, %v540
        %v542 = vrot.slane %v537, %v541
        %v543 = vlaneseq
        %v544 = vshrl.u32 %v543, 7
        %v545 = vsub.s32 1, %v544
        %v546 = vrot.slane %v537, %v545
        %v581 = vunpack.c.l.b16 %v505
        %v582 = vunpack.c.h.b16 %v505
        %v583 = vunpack.c.l.b16 %v506
        %v584 = vunpack.c.h.b16 %v506
        %v585 = vunpack.c.l.b16 %v507
        %v586 = vunpack.c.h.b16 %v507
        %v587 = vunpack.c.l.b16 %v508
        %v588 = vunpack.c.h.b16 %v508
        %v589 = vunpack.c.l.b16 %v509
        %v590 = vunpack.c.h.b16 %v509
        %v591 = vunpack.c.l.b16 %v510
        %v592 = vunpack.c.h.b16 %v510
        %v593 = vunpack.c.l.b16 %v511
        %v594 = vunpack.c.h.b16 %v511
        %v595 = vunpack.c.l.b16 %v512
        %v596 = vunpack.c.h.b16 %v512
        %v597 = vunpack.c.l.b16 %v513
        %v598 = vunpack.c.h.b16 %v513
        %v599 = vunpack.c.l.b16 %v514
        %v600 = vunpack.c.h.b16 %v514
        %v601 = vunpack.c.l.b16 %v515
        %v602 = vunpack.c.h.b16 %v515
        %v603 = vunpack.c.l.b16 %v516
        %v604 = vunpack.c.h.b16 %v516
        %v605 = vunpack.c.l.b16 %v517
        %v606 = vunpack.c.h.b16 %v517
        %v607 = vunpack.c.l.b16 %v518
        %v608 = vunpack.c.h.b16 %v518
        %v609 = vunpack.c.l.b16 %v519
        %v610 = vunpack.c.h.b16 %v519
        %v611 = vunpack.c.l.b16 %v520
        %v612 = vunpack.c.h.b16 %v520
        %v613 = vunpack.c.l.b16 %v521
        %v614 = vunpack.c.h.b16 %v521
        %v615 = vunpack.c.l.b16 %v522
        %v616 = vunpack.c.h.b16 %v522
        %v617 = vunpack.c.l.b16 %v523
        %v618 = vunpack.c.h.b16 %v523
        %v619 = vunpack.c.l.b16 %v524
        %v620 = vunpack.c.h.b16 %v524
        %v621 = vunpack.c.l.b16 %v525
        %v622 = vunpack.c.h.b16 %v525
        %v623 = vunpack.c.l.b16 %v526
        %v624 = vunpack.c.h.b16 %v526
        %v625 = vunpack.c.l.b16 %v527
        %v626 = vunpack.c.h.b16 %v527
        %v627 = vunpack.c.l.b16 %v528
        %v628 = vunpack.c.h.b16 %v528
        %v629 = vunpack.c.l.b16 %v529
        %v630 = vunpack.c.h.b16 %v529
        %v631 = vunpack.c.l.b16 %v530
        %v632 = vunpack.c.h.b16 %v530
        %v633 = vunpack.c.l.b16 %v531
        %v634 = vunpack.c.h.b16 %v531
        %v635 = vunpack.c.l.b16 %v532
        %v636 = vunpack.c.h.b16 %v532
        %v637 = vunpack.c.l.b16 %v533
        %v638 = vunpack.c.h.b16 %v533
        %v639 = vunpack.c.l.b16 %v534
        %v640 = vunpack.c.h.b16 %v534
        %v641 = vunpack.c.l.b16 %v535
        %v642 = vunpack.c.h.b16 %v535
        %v643 = vunpack.c.l.b16 %v536
        %v644 = vunpack.c.h.b16 %v536
        %v645 = vpack.c.b16 %v583, %v581
        %v646 = vpack.c.b16 %v584, %v582
        %v647 = vpack.c.b16 %v587, %v585
        %v648 = vpack.c.b16 %v588, %v586
        %v649 = vpack.c.b16 %v591, %v589
        %v650 = vpack.c.b16 %v592, %v590
        %v651 = vpack.c.b16 %v595, %v593
        %v652 = vpack.c.b16 %v596, %v594
        %v653 = vpack.c.b16 %v599, %v597
        %v654 = vpack.c.b16 %v600, %v598
        %v655 = vpack.c.b16 %v603, %v601
        %v656 = vpack.c.b16 %v604, %v602
        %v657 = vpack.c.b16 %v607, %v605
        %v658 = vpack.c.b16 %v608, %v606
        %v659 = vpack.c.b16 %v611, %v609
        %v660 = vpack.c.b16 %v612, %v610
        %v661 = vpack.c.b16 %v615, %v613
        %v662 = vpack.c.b16 %v616, %v614
        %v663 = vpack.c.b16 %v619, %v617
        %v664 = vpack.c.b16 %v620, %v618
        %v665 = vpack.c.b16 %v623, %v621
        %v666 = vpack.c.b16 %v624, %v622
        %v667 = vpack.c.b16 %v627, %v625
        %v668 = vpack.c.b16 %v628, %v626
        %v669 = vpack.c.b16 %v631, %v629
        %v670 = vpack.c.b16 %v632, %v630
        %v671 = vpack.c.b16 %v635, %v633
        %v672 = vpack.c.b16 %v636, %v634
        %v673 = vpack.c.b16 %v639, %v637
        %v674 = vpack.c.b16 %v640, %v638
        %v675 = vpack.c.b16 %v643, %v641
        %v676 = vpack.c.b16 %v644, %v642
        %709 = vmatprep.subr.bf16.mxu0 %v646
        %710 = vmatpush1.bf16.msra.mxu0 %v645
        %711 = vmatprep.subr.bf16.mxu0 %v648
        %712 = vmatpush1.bf16.msra.mxu0 %v647
        %713 = vmatprep.subr.bf16.mxu0 %v650
        %714 = vmatpush1.bf16.msra.mxu0 %v649
        %715 = vmatprep.subr.bf16.mxu0 %v652
        %716 = vmatpush1.bf16.msra.mxu0 %v651
        %717 = vmatprep.subr.bf16.mxu0 %v654
        %718 = vmatpush1.bf16.msra.mxu0 %v653
        %719 = vmatprep.subr.bf16.mxu0 %v656
        %720 = vmatpush1.bf16.msra.mxu0 %v655
        %721 = vmatprep.subr.bf16.mxu0 %v658
        %722 = vmatpush1.bf16.msra.mxu0 %v657
        %723 = vmatprep.subr.bf16.mxu0 %v660
        %724 = vmatpush1.bf16.msra.mxu0 %v659
        %725 = vmatprep.subr.bf16.mxu0 %v662
        %726 = vmatpush1.bf16.msra.mxu0 %v661
        %727 = vmatprep.subr.bf16.mxu0 %v664
        %728 = vmatpush1.bf16.msra.mxu0 %v663
        %729 = vmatprep.subr.bf16.mxu0 %v666
        %730 = vmatpush1.bf16.msra.mxu0 %v665
        %731 = vmatprep.subr.bf16.mxu0 %v668
        %732 = vmatpush1.bf16.msra.mxu0 %v667
        %733 = vmatprep.subr.bf16.mxu0 %v670
        %734 = vmatpush1.bf16.msra.mxu0 %v669
        %735 = vmatprep.subr.bf16.mxu0 %v672
        %736 = vmatpush1.bf16.msra.mxu0 %v671
        %737 = vmatprep.subr.bf16.mxu0 %v674
        %738 = vmatpush1.bf16.msra.mxu0 %v673
        %739 = vmatprep.subr.bf16.mxu0 %v676
        %740 = vmatpush1.bf16.msra.mxu0 %v675
        %741 = vmatprep.mubr.bf16.mxu0 %v490
        %742 = vmatmul.mubr.bf16.gmra.mrb[0].mxu0 %v489
        %v743 = vpop.f32.mrb[0].mxu0
        %v744 = vadd.f32 %v542, %v743
        %v745 = vpop.f32.mrb[0].mxu0
        %v746 = vadd.f32 %v546, %v745
        %v747 = vpop.f32.mrb[0].mxu0
        %v748 = vadd.f32 %v542, %v747
        %v749 = vpop.f32.mrb[0].mxu0
        %v750 = vadd.f32 %v546, %v749
        %751 = vmatprep.mubr.bf16.mxu0 %v492
        %752 = vmatmul.mubr.bf16.gmra.mrb[0].mxu0 %v491
        %v753 = vpop.f32.mrb[0].mxu0
        %v754 = vadd.f32 %v542, %v753
        %v755 = vpop.f32.mrb[0].mxu0
        %v756 = vadd.f32 %v546, %v755
        %v757 = vpop.f32.mrb[0].mxu0
        %v758 = vadd.f32 %v542, %v757
        %v759 = vpop.f32.mrb[0].mxu0
        %v760 = vadd.f32 %v546, %v759
        %761 = vmatprep.mubr.bf16.mxu0 %v494
        %762 = vmatmul.mubr.bf16.gmra.mrb[0].mxu0 %v493
        %v763 = vpop.f32.mrb[0].mxu0
        %v764 = vadd.f32 %v542, %v763
        %v765 = vpop.f32.mrb[0].mxu0
        %v766 = vadd.f32 %v546, %v765
        %v767 = vpop.f32.mrb[0].mxu0
        %v768 = vadd.f32 %v542, %v767
        %v769 = vpop.f32.mrb[0].mxu0
        %v770 = vadd.f32 %v546, %v769
        %771 = vmatprep.mubr.bf16.mxu0 %v496
        %772 = vmatmul.mubr.bf16.gmra.mrb[0].mxu0 %v495
        %v773 = vpop.f32.mrb[0].mxu0
        %v774 = vadd.f32 %v542, %v773
        %v775 = vpop.f32.mrb[0].mxu0
        %v776 = vadd.f32 %v546, %v775
        %v777 = vpop.f32.mrb[0].mxu0
        %v778 = vadd.f32 %v542, %v777
        %v779 = vpop.f32.mrb[0].mxu0
        %v780 = vadd.f32 %v546, %v779
        %781 = vmatprep.mubr.bf16.mxu0 %v498
        %782 = vmatmul.mubr.bf16.gmra.mrb[0].mxu0 %v497
        %v783 = vpop.f32.mrb[0].mxu0
        %v784 = vadd.f32 %v542, %v783
        %v785 = vpop.f32.mrb[0].mxu0
        %v786 = vadd.f32 %v546, %v785
        %v787 = vpop.f32.mrb[0].mxu0
        %v788 = vadd.f32 %v542, %v787
        %v789 = vpop.f32.mrb[0].mxu0
        %v790 = vadd.f32 %v546, %v789
        %791 = vmatprep.mubr.bf16.mxu0 %v500
        %792 = vmatmul.mubr.bf16.gmra.mrb[0].mxu0 %v499
        %v793 = vpop.f32.mrb[0].mxu0
        %v794 = vadd.f32 %v542, %v793
        %v795 = vpop.f32.mrb[0].mxu0
        %v796 = vadd.f32 %v546, %v795
        %v797 = vpop.f32.mrb[0].mxu0
        %v798 = vadd.f32 %v542, %v797
        %v799 = vpop.f32.mrb[0].mxu0
        %v800 = vadd.f32 %v546, %v799
        %801 = vmatprep.mubr.bf16.mxu0 %v502
        %802 = vmatmul.mubr.bf16.gmra.mrb[0].mxu0 %v501
        %v803 = vpop.f32.mrb[0].mxu0
        %v804 = vadd.f32 %v542, %v803
        %v805 = vpop.f32.mrb[0].mxu0
        %v806 = vadd.f32 %v546, %v805
        %v807 = vpop.f32.mrb[0].mxu0
        %v808 = vadd.f32 %v542, %v807
        %v809 = vpop.f32.mrb[0].mxu0
        %v810 = vadd.f32 %v546, %v809
        %811 = vmatprep.mubr.bf16.mxu0 %v504
        %812 = vmatmul.mubr.bf16.gmra.mrb[0].mxu0 %v503
        %v813 = vpop.f32.mrb[0].mxu0
        %v814 = vadd.f32 %v542, %v813
        %v815 = vpop.f32.mrb[0].mxu0
        %v816 = vadd.f32 %v546, %v815
        %v817 = vpop.f32.mrb[0].mxu0
        %v818 = vadd.f32 %v542, %v817
        %v819 = vpop.f32.mrb[0].mxu0
        %v820 = vadd.f32 %v546, %v819
        %821 = vdwg.mxu0
        %822 = vst [vmem:[%s218] sm:$0xff] %v744
        %823 = vst [vmem:[%s218 + $0x8] sm:$0xff] %v746
        %824 = vst [vmem:[%s218 + $0x10] sm:$0xff] %v748
        %825 = vst [vmem:[%s218 + $0x18] sm:$0xff] %v750
        %826 = vst [vmem:[%s218 + $0x20] sm:$0xff] %v754
        %827 = vst [vmem:[%s218 + $0x28] sm:$0xff] %v756
        %828 = vst [vmem:[%s218 + $0x30] sm:$0xff] %v758
        %829 = vst [vmem:[%s218 + $0x38] sm:$0xff] %v760
        %830 = vst [vmem:[%s218 + $0x40] sm:$0xff] %v764
        %831 = vst [vmem:[%s218 + $0x48] sm:$0xff] %v766
        %832 = vst [vmem:[%s218 + $0x50] sm:$0xff] %v768
        %833 = vst [vmem:[%s218 + $0x58] sm:$0xff] %v770
        %834 = vst [vmem:[%s218 + $0x60] sm:$0xff] %v774
        %835 = vst [vmem:[%s218 + $0x68] sm:$0xff] %v776
        %836 = vst [vmem:[%s218 + $0x70] sm:$0xff] %v778
        %837 = vst [vmem:[%s218 + $0x78] sm:$0xff] %v780
        %838 = vst [vmem:[%s218 + $0x80] sm:$0xff] %v784
        %839 = vst [vmem:[%s218 + $0x88] sm:$0xff] %v786
        %840 = vst [vmem:[%s218 + $0x90] sm:$0xff] %v788
        %841 = vst [vmem:[%s218 + $0x98] sm:$0xff] %v790
        %842 = vst [vmem:[%s218 + $0xa0] sm:$0xff] %v794
        %843 = vst [vmem:[%s218 + $0xa8] sm:$0xff] %v796
        %844 = vst [vmem:[%s218 + $0xb0] sm:$0xff] %v798
        %845 = vst [vmem:[%s218 + $0xb8] sm:$0xff] %v800
        %846 = vst [vmem:[%s218 + $0xc0] sm:$0xff] %v804
        %847 = vst [vmem:[%s218 + $0xc8] sm:$0xff] %v806
        %848 = vst [vmem:[%s218 + $0xd0] sm:$0xff] %v808
        %849 = vst [vmem:[%s218 + $0xd8] sm:$0xff] %v810
        %850 = vst [vmem:[%s218 + $0xe0] sm:$0xff] %v814
        %851 = vst [vmem:[%s218 + $0xe8] sm:$0xff] %v816
        %852 = vst [vmem:[%s218 + $0xf0] sm:$0xff] %v818
        %853 = vst [vmem:[%s218 + $0xf8] sm:$0xff] %v820
        %s854 = sand.u32 %s137, 1
        %s855 = scalar_lea.sflag [#allocation3], %s854
        %s856 = sand.u32 %s137, 1
        %s857 = smul.addr %s856, 256
        %s858 = scalar_lea.vmem [#allocation2], %s857
        // Predicated region
        $region41: #{hybrid_embed_forward.1} parent=39 // pred_check
          %p859 = pneg %p147
        $region42: #{hybrid_embed_forward.1} parent=39 // pred_check_branch
          %861 = sbr.rel (%p859) target = $region44
        $region43: #{hybrid_embed_forward.1} parent=39 // pred_region
          %s862 = smul.u32 16, %s19
          %s864 = ssub.s32 4096, 4096
          %865 = vsyncadd %s855, %s864
          %s866 = smul.addr %s862, 2
          %s867 = smul.addr %s866, 128
          %s868 = scalar_lea.hbm %s5, %s867
          %s869 = sshll.u32 %s858, 4
          %s870 = int_to_ptr.vmem [resolvable:$true] %s869
          %875 = dma.vmem_to_hbm [thread:$0]  %s870, 4096, %s868, %s855, 256, 256, 16
        $region44: #{hybrid_embed_forward.1} parent=39 // pred_fallthru
          _
      $region40: #{hybrid_embed_forward.1} parent=5 // pred_fallthru
        _
      %p876 = scmp.le.s32.totalorder 2, %s14
      // Predicated region
      $region45: #{hybrid_embed_forward.1} parent=5 // pred_check
        %p877 = pneg %p876
      $region46: #{hybrid_embed_forward.1} parent=5 // pred_check_branch
        %879 = sbr.rel (%p877) target = $region48
      $region47: #{hybrid_embed_forward.1} parent=5 // pred_region
        %s880 = ssub.s32 %s14, 2
        // Predicated region
        $region49: #{hybrid_embed_forward.1} parent=47 // pred_check
          %p881 = pneg %p153
        $region50: #{hybrid_embed_forward.1} parent=47 // pred_check_branch
          %883 = sbr.rel (%p881) target = $region52
        $region51: #{hybrid_embed_forward.1} parent=47 // pred_region
          %s884 = sand.u32 %s138, 1
          %s885 = scalar_lea.sflag [#allocation3], %s884
          %s886 = sand.u32 %s138, 1
          %s887 = smul.addr %s886, 256
          %s888 = scalar_lea.vmem [#allocation2], %s887
          %889 = dma.done %s885, 4096
        $region52: #{hybrid_embed_forward.1} parent=47 // pred_fallthru
          _
      $region48: #{hybrid_embed_forward.1} parent=5 // pred_fallthru
        _
    $region6: #{hybrid_embed_forward.1} parent=1 // loop_footer
      %s18 = sadd.s32 1, %s14
    $region7: #{hybrid_embed_forward.1} parent=1 // loop_footer_branch
      %13 = sbr.rel target = $region3
    $region8: #{hybrid_embed_forward.1} parent=1 // loop_exit
      _
    %890 = vsyncpa [#allocation3], 1
    %s891 = scalar_lea.sflag [#allocation3], 1
    %892 = vsyncpa %s891, 1

// kernel: hybrid_embed_forward.1
$region0: #{hybrid_embed_forward.1}
  #allocation0 [shape = 'u32[]', space=smem, size = 0x4, offset = 0x4, fixed_abs, tag = 'smem constant byte address 0x4 - core index']
  #allocation1 [shape = 'u32[144,128]{1,0:T(1,128)}', space=vmem, size = 0x12000, scoped, tag = 'internal scratch']
  %s0 = inlined_call_operand.vmem [shape: bf16[512,32], index: 0, kind: input, shape index: {}]
  %s1 = inlined_call_operand.vmem [shape: bf16[32,256], index: 1, kind: input, shape index: {}]
  %s2 = inlined_call_operand.vmem [shape: f32[1,256], index: 2, kind: input, shape index: {}]
  %s3 = inlined_call_operand.vmem [shape: bf16[256,256], index: 3, kind: input, shape index: {}]
  %s4 = inlined_call_operand.vmem [shape: f32[1,256], index: 4, kind: input, shape index: {}]
  %s5 = inlined_call_operand.hbm [shape: f32[512,256], index: 5, kind: output, shape index: {}]
  %s6 = sld [smem:[#allocation0]]
  $region53: #{hybrid_embed_forward.1} parent=0
    _
  %s8 = ssub.s32 1, %s6
  %s9 = scalar_select 0, %s8, %s6
  $region1: #{hybrid_embed_forward.1} parent=0
    #allocation2 [shape = 'u8[262144]{0}', space=vmem, size = 0x40000, scoped, tag = 'output window, operand 0']
    #allocation3 [shape = 's32[2]{0}', space=sflag, size = 0x8, scoped, tag = 'scoped memory for hybrid_embed_forward.1']
    %10 = vsyncpa [#allocation3], 0
    %s11 = scalar_lea.sflag [#allocation3], 1
    %12 = vsyncpa %s11, 0
    loop: start=0, step=1, limit=6
    $region2: #{hybrid_embed_forward.1} parent=1 // loop_pre_header
      _
    $region3: #{hybrid_embed_forward.1} parent=1 // loop_header
      %s14 = sphi 0, %s18
      %p15 = scmp.ge.s32.totalorder %s14, 6
      %s24 = sphi 0, %s26
      %s27 = sphi 0, %s24
      %s28 = sphi 0, %s27
      %s44 = sphi 0, %s28
      %s48 = sphi 0, %s48
      %s50 = sphi 0, %s48
      %s51 = sphi 0, %s50
      %s65 = sphi 0, %s51
      %s69 = sphi 0, %s69
      %s71 = sphi 0, %s69
      %s72 = sphi 0, %s71
      %s86 = sphi 0, %s72
      %s90 = sphi 0, %s90
      %s92 = sphi 0, %s90
      %s93 = sphi 0, %s92
      %s107 = sphi 0, %s93
      %s111 = sphi 0, %s111
      %s113 = sphi 0, %s111
      %s114 = sphi 0, %s113
      %s128 = sphi 0, %s114
      %s134 = sphi 0, %s136
      %s137 = sphi 0, %s134
      %s138 = sphi 0, %s137
      %s154 = sphi 0, %s138
    $region4: #{hybrid_embed_forward.1} parent=1 // loop_header_branch
      %17 = sbr.rel (%p15) target = $region8
    $region5: #{hybrid_embed_forward.1} parent=1 // loop_body
      %s19 = ssub.s32 %s14, 1
      %s20 = ssub.s32 %s14, 2
      %s21 = sadd.s32 %s14, 1
      %s22 = ssub.s32 %s14, %s21
      %p23 = scmp.eq.s32.totalorder %s22, 0
      %s25 = sadd.s32 %s24, 1
      %s26 = scalar_select %p23, %s24, %s25
      %p29 = pneg %p23
      %p30 = scmp.eq.s32.totalorder %s14, 3
      %p31 = por %p29, %p30
      %p32 = scmp.ne.s32.totalorder %s24, %s27
      %p33 = scmp.eq.s32.totalorder %s14, 0
      %p34 = por %p32, %p33
      %p35 = scmp.ne.s32.totalorder %s24, %s27
      %p36 = scmp.eq.s32.totalorder %s19, 3
      %p37 = por %p35, %p36
      %p38 = scmp.ne.s32.totalorder %s27, %s28
      %p39 = scmp.eq.s32.totalorder %s19, 0
      %p40 = por %p38, %p39
      %p41 = scmp.ne.s32.totalorder %s27, %s28
      %p42 = scmp.eq.s32.totalorder %s20, 3
      %p43 = por %p41, %p42
      %p45 = scmp.ne.s32.totalorder %s28, %s44
      %p46 = scmp.eq.s32.totalorder %s20, 0
      %p47 = por %p45, %p46
      %s49 = sadd.s32 %s48, 1
      %p52 = scmp.eq.s32.totalorder %s14, 3
      %p53 = scmp.ne.s32.totalorder %s48, %s50
      %p54 = scmp.eq.s32.totalorder %s14, 0
      %p55 = por %p53, %p54
      %p56 = scmp.ne.s32.totalorder %s48, %s50
      %p57 = scmp.eq.s32.totalorder %s19, 3
      %p58 = por %p56, %p57
      %p59 = scmp.ne.s32.totalorder %s50, %s51
      %p60 = scmp.eq.s32.totalorder %s19, 0
      %p61 = por %p59, %p60
      %p62 = scmp.ne.s32.totalorder %s50, %s51
      %p63 = scmp.eq.s32.totalorder %s20, 3
      %p64 = por %p62, %p63
      %p66 = scmp.ne.s32.totalorder %s51, %s65
      %p67 = scmp.eq.s32.totalorder %s20, 0
      %p68 = por %p66, %p67
      %s70 = sadd.s32 %s69, 1
      %p73 = scmp.eq.s32.totalorder %s14, 3
      %p74 = scmp.ne.s32.totalorder %s69, %s71
      %p75 = scmp.eq.s32.totalorder %s14, 0
      %p76 = por %p74, %p75
      %p77 = scmp.ne.s32.totalorder %s69, %s71
      %p78 = scmp.eq.s32.totalorder %s19, 3
      %p79 = por %p77, %p78
      %p80 = scmp.ne.s32.totalorder %s71, %s72
      %p81 = scmp.eq.s32.totalorder %s19, 0
      %p82 = por %p80, %p81
      %p83 = scmp.ne.s32.totalorder %s71, %s72
      %p84 = scmp.eq.s32.totalorder %s20, 3
      %p85 = por %p83, %p84
      %p87 = scmp.ne.s32.totalorder %s72, %s86
      %p88 = scmp.eq.s32.totalorder %s20, 0
      %p89 = por %p87, %p88
      %s91 = sadd.s32 %s90, 1
      %p94 = scmp.eq.s32.totalorder %s14, 3
      %p95 = scmp.ne.s32.totalorder %s90, %s92
      %p96 = scmp.eq.s32.totalorder %s14, 0
      %p97 = por %p95, %p96
      %p98 = scmp.ne.s32.totalorder %s90, %s92
      %p99 = scmp.eq.s32.totalorder %s19, 3
      %p100 = por %p98, %p99
      %p101 = scmp.ne.s32.totalorder %s92, %s93
      %p102 = scmp.eq.s32.totalorder %s19, 0
      %p103 = por %p101, %p102
      %p104 = scmp.ne.s32.totalorder %s92, %s93
      %p105 = scmp.eq.s32.totalorder %s20, 3
      %p106 = por %p104, %p105
      %p108 = scmp.ne.s32.totalorder %s93, %s107
      %p109 = scmp.eq.s32.totalorder %s20, 0
      %p110 = por %p108, %p109
      %s112 = sadd.s32 %s111, 1
      %p115 = scmp.eq.s32.totalorder %s14, 3
      %p116 = scmp.ne.s32.totalorder %s111, %s113
      %p117 = scmp.eq.s32.totalorder %s14, 0
      %p118 = por %p116, %p117
      %p119 = scmp.ne.s32.totalorder %s111, %s113
      %p120 = scmp.eq.s32.totalorder %s19, 3
      %p121 = por %p119, %p120
      %p122 = scmp.ne.s32.totalorder %s113, %s114
      %p123 = scmp.eq.s32.totalorder %s19, 0
      %p124 = por %p122, %p123
      %p125 = scmp.ne.s32.totalorder %s113, %s114
      %p126 = scmp.eq.s32.totalorder %s20, 3
      %p127 = por %p125, %p126
      %p129 = scmp.ne.s32.totalorder %s114, %s128
      %p130 = scmp.eq.s32.totalorder %s20, 0
      %p131 = por %p129, %p130
      %s132 = ssub.s32 %s14, %s21
      %p133 = scmp.eq.s32.totalorder %s132, 0
      %s135 = sadd.s32 %s134, 1
      %s136 = scalar_select %p133, %s134, %s135
      %p139 = pneg %p133
      %p140 = scmp.eq.s32.totalorder %s14, 3
      %p141 = por %p139, %p140
      %p142 = scmp.ne.s32.totalorder %s134, %s137
      %p143 = scmp.eq.s32.totalorder %s14, 0
      %p144 = por %p142, %p143
      %p145 = scmp.ne.s32.totalorder %s134, %s137
      %p146 = scmp.eq.s32.totalorder %s19, 3
      %p147 = por %p145, %p146
      %p148 = scmp.ne.s32.totalorder %s137, %s138
      %p149 = scmp.eq.s32.totalorder %s19, 0
      %p150 = por %p148, %p149
      %p151 = scmp.ne.s32.totalorder %s137, %s138
      %p152 = scmp.eq.s32.totalorder %s20, 3
      %p153 = por %p151, %p152
      %p155 = scmp.ne.s32.totalorder %s138, %s154
      %p156 = scmp.eq.s32.totalorder %s20, 0
      %p157 = por %p155, %p156
      %p158 = scmp.le.s32.totalorder 1, %s14
      %p159 = scmp.lt.s32.totalorder %s14, 5
      %p160 = pnand %p158, %p159
      %p161 = pneg %p160
      // Predicated region
      $region9: #{hybrid_embed_forward.1} parent=5 // pred_check
        _
      $region10: #{hybrid_embed_forward.1} parent=5 // pred_check_branch
        %163 = sbr.rel (%p160) target = $region12
      $region11: #{hybrid_embed_forward.1} parent=5 // pred_region
        %s164 = ssub.s32 %s14, 1
        // Predicated region
        $region13: #{hybrid_embed_forward.1} parent=11 // pred_check
          %p165 = pneg %p61
        $region14: #{hybrid_embed_forward.1} parent=11 // pred_check_branch
          %167 = sbr.rel (%p165) target = $region16
        $region15: #{hybrid_embed_forward.1} parent=11 // pred_region
          _
        $region16: #{hybrid_embed_forward.1} parent=11 // pred_fallthru
          _
        // Predicated region
        $region17: #{hybrid_embed_forward.1} parent=11 // pred_check
          %p168 = pneg %p82
        $region18: #{hybrid_embed_forward.1} parent=11 // pred_check_branch
          %170 = sbr.rel (%p168) target = $region20
        $region19: #{hybrid_embed_forward.1} parent=11 // pred_region
          _
        $region20: #{hybrid_embed_forward.1} parent=11 // pred_fallthru
          _
        // Predicated region
        $region21: #{hybrid_embed_forward.1} parent=11 // pred_check
          %p171 = pneg %p103
        $region22: #{hybrid_embed_forward.1} parent=11 // pred_check_branch
          %173 = sbr.rel (%p171) target = $region24
        $region23: #{hybrid_embed_forward.1} parent=11 // pred_region
          _
        $region24: #{hybrid_embed_forward.1} parent=11 // pred_fallthru
          _
        // Predicated region
        $region25: #{hybrid_embed_forward.1} parent=11 // pred_check
          %p174 = pneg %p124
        $region26: #{hybrid_embed_forward.1} parent=11 // pred_check_branch
          %176 = sbr.rel (%p174) target = $region28
        $region27: #{hybrid_embed_forward.1} parent=11 // pred_region
          _
        $region28: #{hybrid_embed_forward.1} parent=11 // pred_fallthru
          _
      $region12: #{hybrid_embed_forward.1} parent=5 // pred_fallthru
        _
      %p177 = scmp.lt.s32.totalorder %s14, 4
      // Predicated region
      $region29: #{hybrid_embed_forward.1} parent=5 // pred_check
        %p178 = pneg %p177
      $region30: #{hybrid_embed_forward.1} parent=5 // pred_check_branch
        %180 = sbr.rel (%p178) target = $region32
      $region31: #{hybrid_embed_forward.1} parent=5 // pred_region
        // Predicated region
        $region33: #{hybrid_embed_forward.1} parent=31 // pred_check
          %p181 = pneg %p34
        $region34: #{hybrid_embed_forward.1} parent=31 // pred_check_branch
          %183 = sbr.rel (%p181) target = $region36
        $region35: #{hybrid_embed_forward.1} parent=31 // pred_region
          %s184 = smul.u32 16, %s14
          %p185 = scmp.lt.s32.totalorder %s184, 63
          %s186 = scalar_select %p185, %s184, 63
          %s187 = smul.addr %s186, 4
          %s188 = scalar_lea.vmem %s0, %s187
          %s189 = smul.u32 16, %s14
        $region36: #{hybrid_embed_forward.1} parent=31 // pred_fallthru
          _
      $region32: #{hybrid_embed_forward.1} parent=5 // pred_fallthru
        _
      %p190 = scmp.le.s32.totalorder 1, %s14
      %p191 = scmp.lt.s32.totalorder %s14, 5
      %p192 = pnand %p190, %p191
      %p193 = pneg %p192
      // Predicated region
      $region37: #{hybrid_embed_forward.1} parent=5 // pred_check
        _
      $region38: #{hybrid_embed_forward.1} parent=5 // pred_check_branch
        %195 = sbr.rel (%p192) target = $region40
      $region39: #{hybrid_embed_forward.1} parent=5 // pred_region
        %s196 = ssub.s32 %s14, 1
        %s197 = smul.u32 16, %s19
        %p198 = scmp.lt.s32.totalorder %s197, 63
        %s199 = scalar_select %p198, %s197, 63
        %s200 = smul.addr %s199, 4
        %s201 = scalar_lea.vmem %s0, %s200
        %p202 = pneg %p40
        %p203 = pneg %p37
        %p204 = pneg %p61
        %p205 = pneg %p58
        %p206 = pneg %p82
        %p207 = pneg %p79
        %p208 = pneg %p103
        %p209 = pneg %p100
        %p210 = pneg %p124
        %p211 = pneg %p121
        %p212 = pneg %p150
        %p213 = pneg %p147
        %s214 = sand.u32 %s137, 1
        %s215 = scalar_lea.sflag [#allocation3], %s214
        %s216 = sand.u32 %s137, 1
        %s217 = smul.addr %s216, 256
        %s218 = scalar_lea.vmem [#allocation2], %s217
        %s219 = smul.u32 16, %s19
        %p220 = scmp.lt.s32.totalorder %s219, 63
        %s221 = scalar_select %p220, %s219, 63
        %s222 = smul.addr %s221, 4
        %s223 = scalar_lea.vmem %s0, %s222
        %s224 = smul.u32 16, %s19
        %s225 = smul.u32 16, %s19
        %v227 = vld [vmem:[%s223] sm:$0xf]
        %v228 = vld [vmem:[%s223 + $0x4] sm:$0xf]
        %v229 = vld [vmem:[%s223 + $0x8] sm:$0xf]
        %v230 = vld [vmem:[%s223 + $0xc] sm:$0xf]
        %v231 = vld [vmem:[%s223 + $0x10] sm:$0xf]
        %v232 = vld [vmem:[%s223 + $0x14] sm:$0xf]
        %v233 = vld [vmem:[%s223 + $0x18] sm:$0xf]
        %v234 = vld [vmem:[%s223 + $0x1c] sm:$0xf]
        %v235 = vld [vmem:[%s223 + $0x20] sm:$0xf]
        %v236 = vld [vmem:[%s223 + $0x24] sm:$0xf]
        %v237 = vld [vmem:[%s223 + $0x28] sm:$0xf]
        %v238 = vld [vmem:[%s223 + $0x2c] sm:$0xf]
        %v239 = vld [vmem:[%s223 + $0x30] sm:$0xf]
        %v240 = vld [vmem:[%s223 + $0x34] sm:$0xf]
        %v241 = vld [vmem:[%s223 + $0x38] sm:$0xf]
        %v242 = vld [vmem:[%s223 + $0x3c] sm:$0xf]
        %v243 = vld [vmem:[%s1] sm:$0xff]
        %v244 = vld [vmem:[%s1 + $0x8] sm:$0xff]
        %v245 = vld [vmem:[%s1 + $0x10] sm:$0xff]
        %v246 = vld [vmem:[%s1 + $0x18] sm:$0xff]
        %v247 = vld [vmem:[%s2] sm:$0x3]
        %v249 = vlaneseq
        %v250 = vshrl.u32 %v249, 7
        %v251 = vsub.s32 0, %v250
        %v252 = vrot.slane %v247, %v251
        %v253 = vlaneseq
        %v254 = vshrl.u32 %v253, 7
        %v255 = vsub.s32 1, %v254
        %v256 = vrot.slane %v247, %v255
        %v275 = vunpack.c.l.b16 %v227
        %v276 = vunpack.c.l.b16 %v228
        %v277 = vunpack.c.l.b16 %v229
        %v278 = vunpack.c.l.b16 %v230
        %v279 = vunpack.c.l.b16 %v231
        %v280 = vunpack.c.l.b16 %v232
        %v281 = vunpack.c.l.b16 %v233
        %v282 = vunpack.c.l.b16 %v234
        %v283 = vunpack.c.l.b16 %v235
        %v284 = vunpack.c.l.b16 %v236
        %v285 = vunpack.c.l.b16 %v237
        %v286 = vunpack.c.l.b16 %v238
        %v287 = vunpack.c.l.b16 %v239
        %v288 = vunpack.c.l.b16 %v240
        %v289 = vunpack.c.l.b16 %v241
        %v290 = vunpack.c.l.b16 %v242
        %v291 = vpack.c.b16 %v276, %v275
        %v292 = vpack.c.b16 %v278, %v277
        %v293 = vpack.c.b16 %v280, %v279
        %v294 = vpack.c.b16 %v282, %v281
        %v295 = vpack.c.b16 %v284, %v283
        %v296 = vpack.c.b16 %v286, %v285
        %v297 = vpack.c.b16 %v288, %v287
        %v298 = vpack.c.b16 %v290, %v289
        %v303 = vunpack.c.l.b16 %v243
        %v304 = vunpack.c.h.b16 %v243
        %v305 = vunpack.c.l.b16 %v244
        %v306 = vunpack.c.h.b16 %v244
        %v307 = vunpack.c.l.b16 %v245
        %v308 = vunpack.c.h.b16 %v245
        %v309 = vunpack.c.l.b16 %v246
        %v310 = vunpack.c.h.b16 %v246
        %v311 = vpack.c.b16 %v305, %v303
        %v312 = vpack.c.b16 %v306, %v304
        %v313 = vpack.c.b16 %v309, %v307
        %v314 = vpack.c.b16 %v310, %v308
        %vm319 = vcmask 261120
        %v321 = vsel %vm319, %v291, 0
        %v324 = vsel %vm319, %v292, 0
        %v327 = vsel %vm319, %v293, 0
        %v330 = vsel %vm319, %v294, 0
        %v333 = vsel %vm319, %v295, 0
        %v336 = vsel %vm319, %v296, 0
        %v339 = vsel %vm319, %v297, 0
        %v342 = vsel %vm319, %v298, 0
        %344 = vmatprep.subr.bf16.mxu0 %v312
        %345 = vmatpush1.bf16.msra.mxu0 %v311
        %346 = vmatprep.subr.bf16.mxu0 %v314
        %347 = vmatpush1.bf16.msra.mxu0 %v313
        %348 = vmatprep.subr.bf16.mxu0 0
        %349 = vmatpush1.bf16.msra.mxu0 0
        %350 = vmatprep.subr.bf16.mxu0 0
        %351 = vmatpush1.bf16.msra.mxu0 0
        %352 = vmatprep.subr.bf16.mxu0 0
        %353 = vmatpush1.bf16.msra.mxu0 0
        %354 = vmatprep.subr.bf16.mxu0 0
        %355 = vmatpush1.bf16.msra.mxu0 0
        %356 = vmatprep.subr.bf16.mxu0 0
        %357 = vmatpush1.bf16.msra.mxu0 0
        %358 = vmatprep.subr.bf16.mxu0 0
        %359 = vmatpush1.bf16.msra.mxu0 0
        %360 = vmatprep.subr.bf16.mxu0 0
        %361 = vmatpush1.bf16.msra.mxu0 0
        %362 = vmatprep.subr.bf16.mxu0 0
        %363 = vmatpush1.bf16.msra.mxu0 0
        %364 = vmatprep.subr.bf16.mxu0 0
        %365 = vmatpush1.bf16.msra.mxu0 0
        %366 = vmatprep.subr.bf16.mxu0 0
        %367 = vmatpush1.bf16.msra.mxu0 0
        %368 = vmatprep.subr.bf16.mxu0 0
        %369 = vmatpush1.bf16.msra.mxu0 0
        %370 = vmatprep.subr.bf16.mxu0 0
        %371 = vmatpush1.bf16.msra.mxu0 0
        %372 = vmatprep.subr.bf16.mxu0 0
        %373 = vmatpush1.bf16.msra.mxu0 0
        %374 = vmatprep.subr.bf16.mxu0 0
        %375 = vmatpush1.bf16.msra.mxu0 0
        %376 = vmatprep.mubr.bf16.mxu0 0
        %377 = vmatmul.mubr.bf16.gmra.mrb[0].mxu0 %v321
        %v378 = vpop.f32.mrb[0].mxu0
        %v379 = vadd.f32 %v252, %v378
        %v380 = vpop.f32.mrb[0].mxu0
        %v381 = vadd.f32 %v256, %v380
        %v382 = vpop.f32.mrb[0].mxu0
        %v383 = vadd.f32 %v252, %v382
        %v384 = vpop.f32.mrb[0].mxu0
        %v385 = vadd.f32 %v256, %v384
        %386 = vmatprep.mubr.bf16.mxu0 0
        %387 = vmatmul.mubr.bf16.gmra.mrb[0].mxu0 %v324
        %v388 = vpop.f32.mrb[0].mxu0
        %v389 = vadd.f32 %v252, %v388
        %v390 = vpop.f32.mrb[0].mxu0
        %v391 = vadd.f32 %v256, %v390
        %v392 = vpop.f32.mrb[0].mxu0
        %v393 = vadd.f32 %v252, %v392
        %v394 = vpop.f32.mrb[0].mxu0
        %v395 = vadd.f32 %v256, %v394
        %396 = vmatprep.mubr.bf16.mxu0 0
        %397 = vmatmul.mubr.bf16.gmra.mrb[0].mxu0 %v327
        %v398 = vpop.f32.mrb[0].mxu0
        %v399 = vadd.f32 %v252, %v398
        %v400 = vpop.f32.mrb[0].mxu0
        %v401 = vadd.f32 %v256, %v400
        %v402 = vpop.f32.mrb[0].mxu0
        %v403 = vadd.f32 %v252, %v402
        %v404 = vpop.f32.mrb[0].mxu0
        %v405 = vadd.f32 %v256, %v404
        %406 = vmatprep.mubr.bf16.mxu0 0
        %407 = vmatmul.mubr.bf16.gmra.mrb[0].mxu0 %v330
        %v408 = vpop.f32.mrb[0].mxu0
        %v409 = vadd.f32 %v252, %v408
        %v410 = vpop.f32.mrb[0].mxu0
        %v411 = vadd.f32 %v256, %v410
        %v412 = vpop.f32.mrb[0].mxu0
        %v413 = vadd.f32 %v252, %v412
        %v414 = vpop.f32.mrb[0].mxu0
        %v415 = vadd.f32 %v256, %v414
        %416 = vmatprep.mubr.bf16.mxu0 0
        %417 = vmatmul.mubr.bf16.gmra.mrb[0].mxu0 %v333
        %v418 = vpop.f32.mrb[0].mxu0
        %v419 = vadd.f32 %v252, %v418
        %v420 = vpop.f32.mrb[0].mxu0
        %v421 = vadd.f32 %v256, %v420
        %v422 = vpop.f32.mrb[0].mxu0
        %v423 = vadd.f32 %v252, %v422
        %v424 = vpop.f32.mrb[0].mxu0
        %v425 = vadd.f32 %v256, %v424
        %426 = vmatprep.mubr.bf16.mxu0 0
        %427 = vmatmul.mubr.bf16.gmra.mrb[0].mxu0 %v336
        %v428 = vpop.f32.mrb[0].mxu0
        %v429 = vadd.f32 %v252, %v428
        %v430 = vpop.f32.mrb[0].mxu0
        %v431 = vadd.f32 %v256, %v430
        %v432 = vpop.f32.mrb[0].mxu0
        %v433 = vadd.f32 %v252, %v432
        %v434 = vpop.f32.mrb[0].mxu0
        %v435 = vadd.f32 %v256, %v434
        %436 = vmatprep.mubr.bf16.mxu0 0
        %437 = vmatmul.mubr.bf16.gmra.mrb[0].mxu0 %v339
        %v438 = vpop.f32.mrb[0].mxu0
        %v439 = vadd.f32 %v252, %v438
        %v440 = vpop.f32.mrb[0].mxu0
        %v441 = vadd.f32 %v256, %v440
        %v442 = vpop.f32.mrb[0].mxu0
        %v443 = vadd.f32 %v252, %v442
        %v444 = vpop.f32.mrb[0].mxu0
        %v445 = vadd.f32 %v256, %v444
        %446 = vmatprep.mubr.bf16.mxu0 0
        %447 = vmatmul.mubr.bf16.gmra.mrb[0].mxu0 %v342
        %v448 = vpop.f32.mrb[0].mxu0
        %v449 = vadd.f32 %v252, %v448
        %v450 = vpop.f32.mrb[0].mxu0
        %v451 = vadd.f32 %v256, %v450
        %v452 = vpop.f32.mrb[0].mxu0
        %v453 = vadd.f32 %v252, %v452
        %v454 = vpop.f32.mrb[0].mxu0
        %v455 = vadd.f32 %v256, %v454
        %456 = vdwg.mxu0
        %v457 = vmax.f32 %v379, 0.0
        %v458 = vmax.f32 %v381, 0.0
        %v459 = vmax.f32 %v383, 0.0
        %v460 = vmax.f32 %v385, 0.0
        %v461 = vmax.f32 %v389, 0.0
        %v462 = vmax.f32 %v391, 0.0
        %v463 = vmax.f32 %v393, 0.0
        %v464 = vmax.f32 %v395, 0.0
        %v465 = vmax.f32 %v399, 0.0
        %v466 = vmax.f32 %v401, 0.0
        %v467 = vmax.f32 %v403, 0.0
        %v468 = vmax.f32 %v405, 0.0
        %v469 = vmax.f32 %v409, 0.0
        %v470 = vmax.f32 %v411, 0.0
        %v471 = vmax.f32 %v413, 0.0
        %v472 = vmax.f32 %v415, 0.0
        %v473 = vmax.f32 %v419, 0.0
        %v474 = vmax.f32 %v421, 0.0
        %v475 = vmax.f32 %v423, 0.0
        %v476 = vmax.f32 %v425, 0.0
        %v477 = vmax.f32 %v429, 0.0
        %v478 = vmax.f32 %v431, 0.0
        %v479 = vmax.f32 %v433, 0.0
        %v480 = vmax.f32 %v435, 0.0
        %v481 = vmax.f32 %v439, 0.0
        %v482 = vmax.f32 %v441, 0.0
        %v483 = vmax.f32 %v443, 0.0
        %v484 = vmax.f32 %v445, 0.0
        %v485 = vmax.f32 %v449, 0.0
        %v486 = vmax.f32 %v451, 0.0
        %v487 = vmax.f32 %v453, 0.0
        %v488 = vmax.f32 %v455, 0.0
        %v489 = vpack.c.bf16 %v459, %v457
        %v490 = vpack.c.bf16 %v460, %v458
        %v491 = vpack.c.bf16 %v463, %v461
        %v492 = vpack.c.bf16 %v464, %v462
        %v493 = vpack.c.bf16 %v467, %v465
        %v494 = vpack.c.bf16 %v468, %v466
        %v495 = vpack.c.bf16 %v471, %v469
        %v496 = vpack.c.bf16 %v472, %v470
        %v497 = vpack.c.bf16 %v475, %v473
        %v498 = vpack.c.bf16 %v476, %v474
        %v499 = vpack.c.bf16 %v479, %v477
        %v500 = vpack.c.bf16 %v480, %v478
        %v501 = vpack.c.bf16 %v483, %v481
        %v502 = vpack.c.bf16 %v484, %v482
        %v503 = vpack.c.bf16 %v487, %v485
        %v504 = vpack.c.bf16 %v488, %v486
        %v505 = vld [vmem:[%s3] sm:$0xff]
        %v506 = vld [vmem:[%s3 + $0x8] sm:$0xff]
        %v507 = vld [vmem:[%s3 + $0x10] sm:$0xff]
        %v508 = vld [vmem:[%s3 + $0x18] sm:$0xff]
        %v509 = vld [vmem:[%s3 + $0x20] sm:$0xff]
        %v510 = vld [vmem:[%s3 + $0x28] sm:$0xff]
        %v511 = vld [vmem:[%s3 + $0x30] sm:$0xff]
        %v512 = vld [vmem:[%s3 + $0x38] sm:$0xff]
        %v513 = vld [vmem:[%s3 + $0x40] sm:$0xff]
        %v514 = vld [vmem:[%s3 + $0x48] sm:$0xff]
        %v515 = vld [vmem:[%s3 + $0x50] sm:$0xff]
        %v516 = vld [vmem:[%s3 + $0x58] sm:$0xff]
        %v517 = vld [vmem:[%s3 + $0x60] sm:$0xff]
        %v518 = vld [vmem:[%s3 + $0x68] sm:$0xff]
        %v519 = vld [vmem:[%s3 + $0x70] sm:$0xff]
        %v520 = vld [vmem:[%s3 + $0x78] sm:$0xff]
        %v521 = vld [vmem:[%s3 + $0x80] sm:$0xff]
        %v522 = vld [vmem:[%s3 + $0x88] sm:$0xff]
        %v523 = vld [vmem:[%s3 + $0x90] sm:$0xff]
        %v524 = vld [vmem:[%s3 + $0x98] sm:$0xff]
        %v525 = vld [vmem:[%s3 + $0xa0] sm:$0xff]
        %v526 = vld [vmem:[%s3 + $0xa8] sm:$0xff]
        %v527 = vld [vmem:[%s3 + $0xb0] sm:$0xff]
        %v528 = vld [vmem:[%s3 + $0xb8] sm:$0xff]
        %v529 = vld [vmem:[%s3 + $0xc0] sm:$0xff]
        %v530 = vld [vmem:[%s3 + $0xc8] sm:$0xff]
        %v531 = vld [vmem:[%s3 + $0xd0] sm:$0xff]
        %v532 = vld [vmem:[%s3 + $0xd8] sm:$0xff]
        %v533 = vld [vmem:[%s3 + $0xe0] sm:$0xff]
        %v534 = vld [vmem:[%s3 + $0xe8] sm:$0xff]
        %v535 = vld [vmem:[%s3 + $0xf0] sm:$0xff]
        %v536 = vld [vmem:[%s3 + $0xf8] sm:$0xff]
        %v537 = vld [vmem:[%s4] sm:$0x3]
        %v539 = vlaneseq
        %v540 = vshrl.u32 %v539, 7
        %v541 = vsub.s32 0, %v540
        %v542 = vrot.slane %v537, %v541
        %v543 = vlaneseq
        %v544 = vshrl.u32 %v543, 7
        %v545 = vsub.s32 1, %v544
        %v546 = vrot.slane %v537, %v545
        %v581 = vunpack.c.l.b16 %v505
        %v582 = vunpack.c.h.b16 %v505
        %v583 = vunpack.c.l.b16 %v506
        %v584 = vunpack.c.h.b16 %v506
        %v585 = vunpack.c.l.b16 %v507
        %v586 = vunpack.c.h.b16 %v507
        %v587 = vunpack.c.l.b16 %v508
        %v588 = vunpack.c.h.b16 %v508
        %v589 = vunpack.c.l.b16 %v509
        %v590 = vunpack.c.h.b16 %v509
        %v591 = vunpack.c.l.b16 %v510
        %v592 = vunpack.c.h.b16 %v510
        %v593 = vunpack.c.l.b16 %v511
        %v594 = vunpack.c.h.b16 %v511
        %v595 = vunpack.c.l.b16 %v512
        %v596 = vunpack.c.h.b16 %v512
        %v597 = vunpack.c.l.b16 %v513
        %v598 = vunpack.c.h.b16 %v513
        %v599 = vunpack.c.l.b16 %v514
        %v600 = vunpack.c.h.b16 %v514
        %v601 = vunpack.c.l.b16 %v515
        %v602 = vunpack.c.h.b16 %v515
        %v603 = vunpack.c.l.b16 %v516
        %v604 = vunpack.c.h.b16 %v516
        %v605 = vunpack.c.l.b16 %v517
        %v606 = vunpack.c.h.b16 %v517
        %v607 = vunpack.c.l.b16 %v518
        %v608 = vunpack.c.h.b16 %v518
        %v609 = vunpack.c.l.b16 %v519
        %v610 = vunpack.c.h.b16 %v519
        %v611 = vunpack.c.l.b16 %v520
        %v612 = vunpack.c.h.b16 %v520
        %v613 = vunpack.c.l.b16 %v521
        %v614 = vunpack.c.h.b16 %v521
        %v615 = vunpack.c.l.b16 %v522
        %v616 = vunpack.c.h.b16 %v522
        %v617 = vunpack.c.l.b16 %v523
        %v618 = vunpack.c.h.b16 %v523
        %v619 = vunpack.c.l.b16 %v524
        %v620 = vunpack.c.h.b16 %v524
        %v621 = vunpack.c.l.b16 %v525
        %v622 = vunpack.c.h.b16 %v525
        %v623 = vunpack.c.l.b16 %v526
        %v624 = vunpack.c.h.b16 %v526
        %v625 = vunpack.c.l.b16 %v527
        %v626 = vunpack.c.h.b16 %v527
        %v627 = vunpack.c.l.b16 %v528
        %v628 = vunpack.c.h.b16 %v528
        %v629 = vunpack.c.l.b16 %v529
        %v630 = vunpack.c.h.b16 %v529
        %v631 = vunpack.c.l.b16 %v530
        %v632 = vunpack.c.h.b16 %v530
        %v633 = vunpack.c.l.b16 %v531
        %v634 = vunpack.c.h.b16 %v531
        %v635 = vunpack.c.l.b16 %v532
        %v636 = vunpack.c.h.b16 %v532
        %v637 = vunpack.c.l.b16 %v533
        %v638 = vunpack.c.h.b16 %v533
        %v639 = vunpack.c.l.b16 %v534
        %v640 = vunpack.c.h.b16 %v534
        %v641 = vunpack.c.l.b16 %v535
        %v642 = vunpack.c.h.b16 %v535
        %v643 = vunpack.c.l.b16 %v536
        %v644 = vunpack.c.h.b16 %v536
        %v645 = vpack.c.b16 %v583, %v581
        %v646 = vpack.c.b16 %v584, %v582
        %v647 = vpack.c.b16 %v587, %v585
        %v648 = vpack.c.b16 %v588, %v586
        %v649 = vpack.c.b16 %v591, %v589
        %v650 = vpack.c.b16 %v592, %v590
        %v651 = vpack.c.b16 %v595, %v593
        %v652 = vpack.c.b16 %v596, %v594
        %v653 = vpack.c.b16 %v599, %v597
        %v654 = vpack.c.b16 %v600, %v598
        %v655 = vpack.c.b16 %v603, %v601
        %v656 = vpack.c.b16 %v604, %v602
        %v657 = vpack.c.b16 %v607, %v605
        %v658 = vpack.c.b16 %v608, %v606
        %v659 = vpack.c.b16 %v611, %v609
        %v660 = vpack.c.b16 %v612, %v610
        %v661 = vpack.c.b16 %v615, %v613
        %v662 = vpack.c.b16 %v616, %v614
        %v663 = vpack.c.b16 %v619, %v617
        %v664 = vpack.c.b16 %v620, %v618
        %v665 = vpack.c.b16 %v623, %v621
        %v666 = vpack.c.b16 %v624, %v622
        %v667 = vpack.c.b16 %v627, %v625
        %v668 = vpack.c.b16 %v628, %v626
        %v669 = vpack.c.b16 %v631, %v629
        %v670 = vpack.c.b16 %v632, %v630
        %v671 = vpack.c.b16 %v635, %v633
        %v672 = vpack.c.b16 %v636, %v634
        %v673 = vpack.c.b16 %v639, %v637
        %v674 = vpack.c.b16 %v640, %v638
        %v675 = vpack.c.b16 %v643, %v641
        %v676 = vpack.c.b16 %v644, %v642
        %709 = vmatprep.subr.bf16.mxu0 %v646
        %710 = vmatpush1.bf16.msra.mxu0 %v645
        %711 = vmatprep.subr.bf16.mxu0 %v648
        %712 = vmatpush1.bf16.msra.mxu0 %v647
        %713 = vmatprep.subr.bf16.mxu0 %v650
        %714 = vmatpush1.bf16.msra.mxu0 %v649
        %715 = vmatprep.subr.bf16.mxu0 %v652
        %716 = vmatpush1.bf16.msra.mxu0 %v651
        %717 = vmatprep.subr.bf16.mxu0 %v654
        %718 = vmatpush1.bf16.msra.mxu0 %v653
        %719 = vmatprep.subr.bf16.mxu0 %v656
        %720 = vmatpush1.bf16.msra.mxu0 %v655
        %721 = vmatprep.subr.bf16.mxu0 %v658
        %722 = vmatpush1.bf16.msra.mxu0 %v657
        %723 = vmatprep.subr.bf16.mxu0 %v660
        %724 = vmatpush1.bf16.msra.mxu0 %v659
        %725 = vmatprep.subr.bf16.mxu0 %v662
        %726 = vmatpush1.bf16.msra.mxu0 %v661
        %727 = vmatprep.subr.bf16.mxu0 %v664
        %728 = vmatpush1.bf16.msra.mxu0 %v663
        %729 = vmatprep.subr.bf16.mxu0 %v666
        %730 = vmatpush1.bf16.msra.mxu0 %v665
        %731 = vmatprep.subr.bf16.mxu0 %v668
        %732 = vmatpush1.bf16.msra.mxu0 %v667
        %733 = vmatprep.subr.bf16.mxu0 %v670
        %734 = vmatpush1.bf16.msra.mxu0 %v669
        %735 = vmatprep.subr.bf16.mxu0 %v672
        %736 = vmatpush1.bf16.msra.mxu0 %v671
        %737 = vmatprep.subr.bf16.mxu0 %v674
        %738 = vmatpush1.bf16.msra.mxu0 %v673
        %739 = vmatprep.subr.bf16.mxu0 %v676
        %740 = vmatpush1.bf16.msra.mxu0 %v675
        %741 = vmatprep.mubr.bf16.mxu0 %v490
        %742 = vmatmul.mubr.bf16.gmra.mrb[0].mxu0 %v489
        %v743 = vpop.f32.mrb[0].mxu0
        %v744 = vadd.f32 %v542, %v743
        %v745 = vpop.f32.mrb[0].mxu0
        %v746 = vadd.f32 %v546, %v745
        %v747 = vpop.f32.mrb[0].mxu0
        %v748 = vadd.f32 %v542, %v747
        %v749 = vpop.f32.mrb[0].mxu0
        %v750 = vadd.f32 %v546, %v749
        %751 = vmatprep.mubr.bf16.mxu0 %v492
        %752 = vmatmul.mubr.bf16.gmra.mrb[0].mxu0 %v491
        %v753 = vpop.f32.mrb[0].mxu0
        %v754 = vadd.f32 %v542, %v753
        %v755 = vpop.f32.mrb[0].mxu0
        %v756 = vadd.f32 %v546, %v755
        %v757 = vpop.f32.mrb[0].mxu0
        %v758 = vadd.f32 %v542, %v757
        %v759 = vpop.f32.mrb[0].mxu0
        %v760 = vadd.f32 %v546, %v759
        %761 = vmatprep.mubr.bf16.mxu0 %v494
        %762 = vmatmul.mubr.bf16.gmra.mrb[0].mxu0 %v493
        %v763 = vpop.f32.mrb[0].mxu0
        %v764 = vadd.f32 %v542, %v763
        %v765 = vpop.f32.mrb[0].mxu0
        %v766 = vadd.f32 %v546, %v765
        %v767 = vpop.f32.mrb[0].mxu0
        %v768 = vadd.f32 %v542, %v767
        %v769 = vpop.f32.mrb[0].mxu0
        %v770 = vadd.f32 %v546, %v769
        %771 = vmatprep.mubr.bf16.mxu0 %v496
        %772 = vmatmul.mubr.bf16.gmra.mrb[0].mxu0 %v495
        %v773 = vpop.f32.mrb[0].mxu0
        %v774 = vadd.f32 %v542, %v773
        %v775 = vpop.f32.mrb[0].mxu0
        %v776 = vadd.f32 %v546, %v775
        %v777 = vpop.f32.mrb[0].mxu0
        %v778 = vadd.f32 %v542, %v777
        %v779 = vpop.f32.mrb[0].mxu0
        %v780 = vadd.f32 %v546, %v779
        %781 = vmatprep.mubr.bf16.mxu0 %v498
        %782 = vmatmul.mubr.bf16.gmra.mrb[0].mxu0 %v497
        %v783 = vpop.f32.mrb[0].mxu0
        %v784 = vadd.f32 %v542, %v783
        %v785 = vpop.f32.mrb[0].mxu0
        %v786 = vadd.f32 %v546, %v785
        %v787 = vpop.f32.mrb[0].mxu0
        %v788 = vadd.f32 %v542, %v787
        %v789 = vpop.f32.mrb[0].mxu0
        %v790 = vadd.f32 %v546, %v789
        %791 = vmatprep.mubr.bf16.mxu0 %v500
        %792 = vmatmul.mubr.bf16.gmra.mrb[0].mxu0 %v499
        %v793 = vpop.f32.mrb[0].mxu0
        %v794 = vadd.f32 %v542, %v793
        %v795 = vpop.f32.mrb[0].mxu0
        %v796 = vadd.f32 %v546, %v795
        %v797 = vpop.f32.mrb[0].mxu0
        %v798 = vadd.f32 %v542, %v797
        %v799 = vpop.f32.mrb[0].mxu0
        %v800 = vadd.f32 %v546, %v799
        %801 = vmatprep.mubr.bf16.mxu0 %v502
        %802 = vmatmul.mubr.bf16.gmra.mrb[0].mxu0 %v501
        %v803 = vpop.f32.mrb[0].mxu0
        %v804 = vadd.f32 %v542, %v803
        %v805 = vpop.f32.mrb[0].mxu0
        %v806 = vadd.f32 %v546, %v805
        %v807 = vpop.f32.mrb[0].mxu0
        %v808 = vadd.f32 %v542, %v807
        %v809 = vpop.f32.mrb[0].mxu0
        %v810 = vadd.f32 %v546, %v809
        %811 = vmatprep.mubr.bf16.mxu0 %v504
        %812 = vmatmul.mubr.bf16.gmra.mrb[0].mxu0 %v503
        %v813 = vpop.f32.mrb[0].mxu0
        %v814 = vadd.f32 %v542, %v813
        %v815 = vpop.f32.mrb[0].mxu0
        %v816 = vadd.f32 %v546, %v815
        %v817 = vpop.f32.mrb[0].mxu0
        %v818 = vadd.f32 %v542, %v817
        %v819 = vpop.f32.mrb[0].mxu0
        %v820 = vadd.f32 %v546, %v819
        %821 = vdwg.mxu0
        %822 = vst [vmem:[%s218] sm:$0xff] %v744
        %823 = vst [vmem:[%s218 + $0x8] sm:$0xff] %v746
        %824 = vst [vmem:[%s218 + $0x10] sm:$0xff] %v748
        %825 = vst [vmem:[%s218 + $0x18] sm:$0xff] %v750
        %826 = vst [vmem:[%s218 + $0x20] sm:$0xff] %v754
        %827 = vst [vmem:[%s218 + $0x28] sm:$0xff] %v756
        %828 = vst [vmem:[%s218 + $0x30] sm:$0xff] %v758
        %829 = vst [vmem:[%s218 + $0x38] sm:$0xff] %v760
        %830 = vst [vmem:[%s218 + $0x40] sm:$0xff] %v764
        %831 = vst [vmem:[%s218 + $0x48] sm:$0xff] %v766
        %832 = vst [vmem:[%s218 + $0x50] sm:$0xff] %v768
        %833 = vst [vmem:[%s218 + $0x58] sm:$0xff] %v770
        %834 = vst [vmem:[%s218 + $0x60] sm:$0xff] %v774
        %835 = vst [vmem:[%s218 + $0x68] sm:$0xff] %v776
        %836 = vst [vmem:[%s218 + $0x70] sm:$0xff] %v778
        %837 = vst [vmem:[%s218 + $0x78] sm:$0xff] %v780
        %838 = vst [vmem:[%s218 + $0x80] sm:$0xff] %v784
        %839 = vst [vmem:[%s218 + $0x88] sm:$0xff] %v786
        %840 = vst [vmem:[%s218 + $0x90] sm:$0xff] %v788
        %841 = vst [vmem:[%s218 + $0x98] sm:$0xff] %v790
        %842 = vst [vmem:[%s218 + $0xa0] sm:$0xff] %v794
        %843 = vst [vmem:[%s218 + $0xa8] sm:$0xff] %v796
        %844 = vst [vmem:[%s218 + $0xb0] sm:$0xff] %v798
        %845 = vst [vmem:[%s218 + $0xb8] sm:$0xff] %v800
        %846 = vst [vmem:[%s218 + $0xc0] sm:$0xff] %v804
        %847 = vst [vmem:[%s218 + $0xc8] sm:$0xff] %v806
        %848 = vst [vmem:[%s218 + $0xd0] sm:$0xff] %v808
        %849 = vst [vmem:[%s218 + $0xd8] sm:$0xff] %v810
        %850 = vst [vmem:[%s218 + $0xe0] sm:$0xff] %v814
        %851 = vst [vmem:[%s218 + $0xe8] sm:$0xff] %v816
        %852 = vst [vmem:[%s218 + $0xf0] sm:$0xff] %v818
        %853 = vst [vmem:[%s218 + $0xf8] sm:$0xff] %v820
        %s854 = sand.u32 %s137, 1
        %s855 = scalar_lea.sflag [#allocation3], %s854
        %s856 = sand.u32 %s137, 1
        %s857 = smul.addr %s856, 256
        %s858 = scalar_lea.vmem [#allocation2], %s857
        // Predicated region
        $region41: #{hybrid_embed_forward.1} parent=39 // pred_check
          %p859 = pneg %p147
        $region42: #{hybrid_embed_forward.1} parent=39 // pred_check_branch
          %861 = sbr.rel (%p859) target = $region44
        $region43: #{hybrid_embed_forward.1} parent=39 // pred_region
          %s862 = smul.u32 16, %s19
          %s864 = ssub.s32 4096, 4096
          %865 = vsyncadd %s855, %s864
          %s866 = smul.addr %s862, 2
          %s867 = smul.addr %s866, 128
          %s868 = scalar_lea.hbm %s5, %s867
          %s869 = sshll.u32 %s858, 4
          %s870 = int_to_ptr.vmem [resolvable:$true] %s869
          %875 = dma.vmem_to_hbm [thread:$0]  %s870, 4096, %s868, %s855, 256, 256, 16
        $region44: #{hybrid_embed_forward.1} parent=39 // pred_fallthru
          _
      $region40: #{hybrid_embed_forward.1} parent=5 // pred_fallthru
        _
      %p876 = scmp.le.s32.totalorder 2, %s14
      // Predicated region
      $region45: #{hybrid_embed_forward.1} parent=5 // pred_check
        %p877 = pneg %p876
      $region46: #{hybrid_embed_forward.1} parent=5 // pred_check_branch
        %879 = sbr.rel (%p877) target = $region48
      $region47: #{hybrid_embed_forward.1} parent=5 // pred_region
        %s880 = ssub.s32 %s14, 2
        // Predicated region
        $region49: #{hybrid_embed_forward.1} parent=47 // pred_check
          %p881 = pneg %p153
        $region50: #{hybrid_embed_forward.1} parent=47 // pred_check_branch
          %883 = sbr.rel (%p881) target = $region52
        $region51: #{hybrid_embed_forward.1} parent=47 // pred_region
          %s884 = sand.u32 %s138, 1
          %s885 = scalar_lea.sflag [#allocation3], %s884
          %s886 = sand.u32 %s138, 1
          %s887 = smul.addr %s886, 256
          %s888 = scalar_lea.vmem [#allocation2], %s887
          %889 = dma.done %s885, 4096
        $region52: #{hybrid_embed_forward.1} parent=47 // pred_fallthru
          _
      $region48: #{hybrid_embed_forward.1} parent=5 // pred_fallthru
        _
    $region6: #{hybrid_embed_forward.1} parent=1 // loop_footer
      %s18 = sadd.s32 1, %s14
    $region7: #{hybrid_embed_forward.1} parent=1 // loop_footer_branch
      %13 = sbr.rel target = $region3
    $region8: #{hybrid_embed_forward.1} parent=1 // loop_exit
      _
    %890 = vsyncpa [#allocation3], 1
    %s891 = scalar_lea.sflag [#allocation3], 1
    %892 = vsyncpa %s891, 1

</llo_original>
